<compile_context>
chip_gen: v5e
topology: v5e:2x2
jax: 0.10.0
libtpu: 0.0.40
codegen_flags: <defaults>
</compile_context>

<pallas_src>
import functools

import jax
import jax.numpy as jnp
from jax import lax
from jax.experimental import pallas as pl
from jax.experimental.pallas import tpu as pltpu


# ----------------------------------------------------------------------------
# Pallas kernel: entire bottleneck for one batch element.
# ----------------------------------------------------------------------------
def bottleneck_kernel(x_ref, w1_ref, w2_ref, w3_ref,
                      b1_ref, b2_ref, b3_ref, o_ref, pad_ref,
                      *, H, W):
    """One batch element of the bottleneck block.

    x_ref  : (1, H*W, Cin) f32
    w1_ref : (Cin, P)      bf16 (BN1 scale folded in)
    w2_ref : (9*P, P)      bf16 (BN2 scale folded in; rows ordered tap-major
                                 with tap index k = 3*dy + dx)
    w3_ref : (P, 4P)       bf16 (BN3 scale folded in)
    b*_ref : (1, C)        f32  folded BN biases
    o_ref  : (1, H*W, 4P)  f32
    pad_ref: (H+2, W+2, P) bf16 VMEM scratch holding the zero-padded conv2
             input (borders zeroed cheaply, interior rewritten each step).
    """
    P = w1_ref.shape[1]
    HW = H * W

    x = x_ref[0]                                            # (HW, Cin) f32

    # ---- conv1 (1x1) + bn1 + relu  (scale folded into w1) -------------------
    out1 = jnp.dot(x.astype(jnp.bfloat16), w1_ref[...],
                   preferred_element_type=jnp.float32)
    out1 = jnp.maximum(out1 + b1_ref[...], 0.0)             # (HW, P) f32

    # ---- conv2 (3x3, pad=1, stride=1) + bn2 + relu ---------------------------
    # Zero only the top/bottom border rows (aligned full-width stores); build
    # the left/right zero padding in-register and overwrite the interior rows.
    zrow = jnp.zeros((1, W + 2, P), pad_ref.dtype)
    pad_ref[0:1, :, :] = zrow
    pad_ref[H + 1:H + 2, :, :] = zrow

    zcol = jnp.zeros((H, 1, P), jnp.float32)
    interior = jnp.concatenate([zcol, out1.reshape(H, W, P), zcol], axis=1)
    pad_ref[1:H + 1, :, :] = interior.astype(pad_ref.dtype)  # (H, W+2, P)

    # im2col: concatenate the 9 shifted taps along the contraction dim and do
    # a single K = 9*P matmul (fills the MXU far better than 9 K=P dots and
    # avoids 8 serial accumulate dependencies).
    taps = [pad_ref[dy:dy + H, dx:dx + W, :].reshape(HW, P)
            for dy in range(3) for dx in range(3)]
    col = jnp.concatenate(taps, axis=-1)                    # (HW, 9P) bf16
    out2 = jnp.dot(col, w2_ref[...], preferred_element_type=jnp.float32)
    out2 = jnp.maximum(out2 + b2_ref[...], 0.0)             # (HW, P) f32

    # ---- conv3 (1x1) + bn3 ---------------------------------------------------
    out3 = jnp.dot(out2.astype(jnp.bfloat16), w3_ref[...],
                   preferred_element_type=jnp.float32)
    out3 = out3 + b3_ref[...]                               # (HW, 4P) f32

    # ---- residual add + relu (identity shortcut: Cin == 4P) ------------------
    o_ref[0] = jnp.maximum(out3 + x, 0.0).astype(o_ref.dtype)


# ----------------------------------------------------------------------------
# Wrapper
# ----------------------------------------------------------------------------
def bottleneck_pallas(x_nchw, params):
    w1, w2, w3 = params["w1"], params["w2"], params["w3"]
    s1, b1 = params["s1"], params["b1"]
    s2, b2 = params["s2"], params["b2"]
    s3, b3 = params["s3"], params["b3"]

    P = w1.shape[1]
    Cout = 4 * P

    # NCHW -> NHWC -> lane-dense (N, H*W, C) slab.
    x = jnp.transpose(x_nchw, (0, 2, 3, 1)).astype(jnp.float32)
    N, H, W, Cin = x.shape
    assert Cin == Cout, "identity shortcut requires inplanes == 4*planes"
    x2d = x.reshape(N, H * W, Cin)

    # Fold BN scales into the conv weights (constants -> free at call time),
    # keep only the biases for the kernel.  Cast weights to bf16 for the MXU.
    w1f = (w1 * s1[None, :]).astype(jnp.bfloat16)                     # (Cin, P)
    w2f = (w2 * s2[None, None, None, :]).reshape(9 * P, P)            # (9P, P)
    w2f = w2f.astype(jnp.bfloat16)
    w3f = (w3 * s3[None, :]).astype(jnp.bfloat16)                     # (P, 4P)
    b1r = b1.reshape(1, P).astype(jnp.float32)
    b2r = b2.reshape(1, P).astype(jnp.float32)
    b3r = b3.reshape(1, Cout).astype(jnp.float32)

    kernel = functools.partial(bottleneck_kernel, H=H, W=W)

    out2d = pl.pallas_call(
        kernel,
        out_shape=jax.ShapeDtypeStruct((N, H * W, Cout), jnp.float32),
        grid_spec=pltpu.PrefetchScalarGridSpec(
            num_scalar_prefetch=0,
            grid=(N,),
            in_specs=[
                pl.BlockSpec((1, H * W, Cin), lambda n: (n, 0, 0)),   # x
                pl.BlockSpec((Cin, P), lambda n: (0, 0)),             # w1
                pl.BlockSpec((9 * P, P), lambda n: (0, 0)),           # w2 (im2col)
                pl.BlockSpec((P, Cout), lambda n: (0, 0)),            # w3
                pl.BlockSpec((1, P), lambda n: (0, 0)),               # b1
                pl.BlockSpec((1, P), lambda n: (0, 0)),               # b2
                pl.BlockSpec((1, Cout), lambda n: (0, 0)),            # b3
            ],
            out_specs=pl.BlockSpec((1, H * W, Cout), lambda n: (n, 0, 0)),
            scratch_shapes=[pltpu.VMEM((H + 2, W + 2, P), jnp.bfloat16)],
        ),
        compiler_params=pltpu.CompilerParams(
            dimension_semantics=("parallel",)),   # megacore sharding on v7x
    )(x2d, w1f, w2f, w3f, b1r, b2r, b3r)

    out = out2d.reshape(N, H, W, Cout)
    return jnp.transpose(out, (0, 3, 1, 2))  # NHWC -> NCHW


# ----------------------------------------------------------------------------
# Pure-JAX f32 reference (for correctness check only)
# ----------------------------------------------------------------------------
def bottleneck_ref(x_nchw, params):
    w1, w2, w3 = params["w1"], params["w2"], params["w3"]
    x = jnp.transpose(x_nchw, (0, 2, 3, 1)).astype(jnp.float32)  # NHWC

    out = jnp.einsum("nhwc,cd->nhwd", x, w1, precision=lax.Precision.HIGHEST)
    out = jnp.maximum(out * params["s1"] + params["b1"], 0.0)

    out = lax.conv_general_dilated(
        out, w2, window_strides=(1, 1), padding=((1, 1), (1, 1)),
        dimension_numbers=("NHWC", "HWIO", "NHWC"),
        precision=lax.Precision.HIGHEST)
    out = jnp.maximum(out * params["s2"] + params["b2"], 0.0)

    out = jnp.einsum("nhwc,cd->nhwd", out, w3, precision=lax.Precision.HIGHEST)
    out = out * params["s3"] + params["b3"]

    out = jnp.maximum(out + x, 0.0)
    return jnp.transpose(out, (0, 3, 1, 2))


# ----------------------------------------------------------------------------
# Deterministic parameter construction (shapes from the PyTorch __init__)
# ----------------------------------------------------------------------------
def make_params(key, inplanes, planes, eps=1e-5):
    P, Cout = planes, 4 * planes
    k = jax.random.split(key, 15)

    # Conv weights stored in matmul-friendly layouts:
    #   conv1: (inplanes, P)   conv2: (3, 3, P, P) == HWIO   conv3: (P, 4P)
    w1 = jax.random.normal(k[0], (inplanes, P), jnp.float32) / jnp.sqrt(inplanes)
    w2 = jax.random.normal(k[1], (3, 3, P, P), jnp.float32) / jnp.sqrt(9.0 * P)
    w3 = jax.random.normal(k[2], (P, Cout), jnp.float32) / jnp.sqrt(P)

    def bn(kg, kb, km, kv, c):
        gamma = jax.random.uniform(kg, (c,), jnp.float32, 0.5, 1.5)
        beta = 0.1 * jax.random.normal(kb, (c,), jnp.float32)
        mean = 0.1 * jax.random.normal(km, (c,), jnp.float32)
        var = jax.random.uniform(kv, (c,), jnp.float32, 0.5, 1.5)
        scale = gamma / jnp.sqrt(var + eps)
        bias = beta - mean * scale
        return scale, bias

    s1, b1 = bn(k[3], k[4], k[5], k[6], P)
    s2, b2 = bn(k[7], k[8], k[9], k[10], P)
    s3, b3 = bn(k[11], k[12], k[13], k[14], Cout)

    return dict(w1=w1, w2=w2, w3=w3, s1=s1, b1=b1, s2=s2, b2=b2, s3=s3, b3=b3)


if __name__ == "__main__":
    # Small but lane-friendly shapes: inplanes=128 == 4*planes (identity
    # shortcut), planes=32, batch=2, spatial 8x8.  x is NCHW like PyTorch.
    N, inplanes, planes, H, W = 2, 128, 32, 8, 8

    key = jax.random.PRNGKey(0)
    kx, kp = jax.random.split(key)
    x = jax.random.normal(kx, (N, inplanes, H, W), jnp.float32)
    params = make_params(kp, inplanes, planes)

    out = jax.block_until_ready(bottleneck_pallas(x, params))
    ref = jax.block_until_ready(bottleneck_ref(x, params))

    assert out.shape == (N, 4 * planes, H, W)
    # bf16 MXU operands (f32 accumulation) -> loosened tolerance vs f32 ref.
    max_err = float(jnp.max(jnp.abs(out - ref)))
    assert jnp.allclose(out, ref, atol=1e-1, rtol=1e-1), f"max abs err {max_err}"
    print("KERNEL_OK")
</pallas_src>

<mosaic_0001>
module attributes {stable_mosaic.version = 11 : i64} {
  func.func @bottleneck_kernel(%arg0: i32, %arg1: memref<1x64x128xf32, #tpu.memory_space<vmem>>, %arg2: memref<128x32xbf16, #tpu.memory_space<vmem>>, %arg3: memref<288x32xbf16, #tpu.memory_space<vmem>>, %arg4: memref<32x128xbf16, #tpu.memory_space<vmem>>, %arg5: memref<1x32xf32, #tpu.memory_space<vmem>>, %arg6: memref<1x32xf32, #tpu.memory_space<vmem>>, %arg7: memref<1x128xf32, #tpu.memory_space<vmem>>, %arg8: memref<1x64x128xf32, #tpu.memory_space<vmem>>, %arg9: memref<10x10x32xbf16, #tpu.memory_space<vmem>>) attributes {dimension_semantics = [#tpu.dimension_semantics<parallel>], iteration_bounds = array<i64: 2>, scalar_prefetch = 0 : i64, scratch_operands = 1 : i64, tpu.core_type = #tpu.core_type<tc>, window_params = [{transform_indices = @transform_0, window_bounds = array<i64: 1, 64, 128>}, {pipeline_mode = #tpu.pipeline_mode<synchronous>, transform_indices = @transform_1, window_bounds = array<i64: 128, 32>}, {pipeline_mode = #tpu.pipeline_mode<synchronous>, transform_indices = @transform_2, window_bounds = array<i64: 288, 32>}, {pipeline_mode = #tpu.pipeline_mode<synchronous>, transform_indices = @transform_3, window_bounds = array<i64: 32, 128>}, {pipeline_mode = #tpu.pipeline_mode<synchronous>, transform_indices = @transform_4, window_bounds = array<i64: 1, 32>}, {pipeline_mode = #tpu.pipeline_mode<synchronous>, transform_indices = @transform_5, window_bounds = array<i64: 1, 32>}, {pipeline_mode = #tpu.pipeline_mode<synchronous>, transform_indices = @transform_6, window_bounds = array<i64: 1, 128>}, {transform_indices = @transform_7, window_bounds = array<i64: 1, 64, 128>}]} {
    %c0 = arith.constant 0 : index
    %c0_0 = arith.constant 0 : index
    %c0_1 = arith.constant 0 : index
    %0 = vector.load %arg1[%c0, %c0_0, %c0_1] : memref<1x64x128xf32, #tpu.memory_space<vmem>>, vector<1x64x128xf32>
    %1 = vector.shape_cast %0 : vector<1x64x128xf32> to vector<64x128xf32>
    %2 = arith.truncf %1 : vector<64x128xf32> to vector<64x128xbf16>
    %c0_2 = arith.constant 0 : index
    %c0_3 = arith.constant 0 : index
    %3 = vector.load %arg2[%c0_2, %c0_3] : memref<128x32xbf16, #tpu.memory_space<vmem>>, vector<128x32xbf16>
    %cst = arith.constant dense<0.000000e+00> : vector<64x32xf32>
    %4 = tpu.matmul %2, %3, %cst {dimension_numbers = #tpu.dot_dimension_numbers<[1], [0], [0], [1], [0, 0, 1, 1], [], []>} : vector<64x128xbf16>, vector<128x32xbf16>, vector<64x32xf32> -> vector<64x32xf32>
    %c0_4 = arith.constant 0 : index
    %c0_5 = arith.constant 0 : index
    %5 = vector.load %arg5[%c0_4, %c0_5] : memref<1x32xf32, #tpu.memory_space<vmem>>, vector<1x32xf32>
    %6 = vector.broadcast %5 : vector<1x32xf32> to vector<64x32xf32>
    %7 = arith.addf %4, %6 : vector<64x32xf32>
    %cst_6 = arith.constant 0.000000e+00 : f32
    %8 = vector.broadcast %cst_6 : f32 to vector<64x32xf32>
    %9 = arith.maximumf %7, %8 : vector<64x32xf32>
    %cst_7 = arith.constant 0.000000e+00 : bf16
    %10 = vector.broadcast %cst_7 : bf16 to vector<1x10x32xbf16>
    %c0_8 = arith.constant 0 : index
    %c0_9 = arith.constant 0 : index
    %c0_10 = arith.constant 0 : index
    %11 = vector.load %arg9[%c0_8, %c0_9, %c0_10] : memref<10x10x32xbf16, #tpu.memory_space<vmem>>, vector<1x10x32xbf16>
    tpu.vector_store %arg9[%c0_8, %c0_9, %c0_10], %10 {strides = array<i32>} : memref<10x10x32xbf16, #tpu.memory_space<vmem>>, vector<1x10x32xbf16>,
    %c9 = arith.constant 9 : index
    %c0_11 = arith.constant 0 : index
    %c0_12 = arith.constant 0 : index
    %12 = vector.load %arg9[%c9, %c0_11, %c0_12] : memref<10x10x32xbf16, #tpu.memory_space<vmem>>, vector<1x10x32xbf16>
    tpu.vector_store %arg9[%c9, %c0_11, %c0_12], %10 {strides = array<i32>} : memref<10x10x32xbf16, #tpu.memory_space<vmem>>, vector<1x10x32xbf16>,
    %cst_13 = arith.constant 0.000000e+00 : f32
    %13 = vector.broadcast %cst_13 : f32 to vector<8x1x32xf32>
    %14 = vector.shape_cast %9 : vector<64x32xf32> to vector<8x8x32xf32>
    %15 = tpu.concatenate %13, %14, %13 in 1 : vector<8x1x32xf32>, vector<8x8x32xf32>, vector<8x1x32xf32> -> vector<8x10x32xf32>
    %16 = arith.truncf %15 : vector<8x10x32xf32> to vector<8x10x32xbf16>
    %c1 = arith.constant 1 : index
    %c0_14 = arith.constant 0 : index
    %c0_15 = arith.constant 0 : index
    %17 = vector.load %arg9[%c1, %c0_14, %c0_15] : memref<10x10x32xbf16, #tpu.memory_space<vmem>>, vector<8x10x32xbf16>
    tpu.vector_store %arg9[%c1, %c0_14, %c0_15], %16 {strides = array<i32>} : memref<10x10x32xbf16, #tpu.memory_space<vmem>>, vector<8x10x32xbf16>,
    %c0_16 = arith.constant 0 : index
    %c0_17 = arith.constant 0 : index
    %c0_18 = arith.constant 0 : index
    %18 = vector.load %arg9[%c0_16, %c0_17, %c0_18] : memref<10x10x32xbf16, #tpu.memory_space<vmem>>, vector<8x8x32xbf16>
    %19 = vector.shape_cast %18 : vector<8x8x32xbf16> to vector<64x32xbf16>
    %c0_19 = arith.constant 0 : index
    %c1_20 = arith.constant 1 : index
    %c0_21 = arith.constant 0 : index
    %20 = vector.load %arg9[%c0_19, %c1_20, %c0_21] : memref<10x10x32xbf16, #tpu.memory_space<vmem>>, vector<8x8x32xbf16>
    %21 = vector.shape_cast %20 : vector<8x8x32xbf16> to vector<64x32xbf16>
    %c0_22 = arith.constant 0 : index
    %c2 = arith.constant 2 : index
    %c0_23 = arith.constant 0 : index
    %22 = vector.load %arg9[%c0_22, %c2, %c0_23] : memref<10x10x32xbf16, #tpu.memory_space<vmem>>, vector<8x8x32xbf16>
    %23 = vector.shape_cast %22 : vector<8x8x32xbf16> to vector<64x32xbf16>
    %c1_24 = arith.constant 1 : index
    %c0_25 = arith.constant 0 : index
    %c0_26 = arith.constant 0 : index
    %24 = vector.load %arg9[%c1_24, %c0_25, %c0_26] : memref<10x10x32xbf16, #tpu.memory_space<vmem>>, vector<8x8x32xbf16>
    %25 = vector.shape_cast %24 : vector<8x8x32xbf16> to vector<64x32xbf16>
    %c1_27 = arith.constant 1 : index
    %c1_28 = arith.constant 1 : index
    %c0_29 = arith.constant 0 : index
    %26 = vector.load %arg9[%c1_27, %c1_28, %c0_29] : memref<10x10x32xbf16, #tpu.memory_space<vmem>>, vector<8x8x32xbf16>
    %27 = vector.shape_cast %26 : vector<8x8x32xbf16> to vector<64x32xbf16>
    %c1_30 = arith.constant 1 : index
    %c2_31 = arith.constant 2 : index
    %c0_32 = arith.constant 0 : index
    %28 = vector.load %arg9[%c1_30, %c2_31, %c0_32] : memref<10x10x32xbf16, #tpu.memory_space<vmem>>, vector<8x8x32xbf16>
    %29 = vector.shape_cast %28 : vector<8x8x32xbf16> to vector<64x32xbf16>
    %c2_33 = arith.constant 2 : index
    %c0_34 = arith.constant 0 : index
    %c0_35 = arith.constant 0 : index
    %30 = vector.load %arg9[%c2_33, %c0_34, %c0_35] : memref<10x10x32xbf16, #tpu.memory_space<vmem>>, vector<8x8x32xbf16>
    %31 = vector.shape_cast %30 : vector<8x8x32xbf16> to vector<64x32xbf16>
    %c2_36 = arith.constant 2 : index
    %c1_37 = arith.constant 1 : index
    %c0_38 = arith.constant 0 : index
    %32 = vector.load %arg9[%c2_36, %c1_37, %c0_38] : memref<10x10x32xbf16, #tpu.memory_space<vmem>>, vector<8x8x32xbf16>
    %33 = vector.shape_cast %32 : vector<8x8x32xbf16> to vector<64x32xbf16>
    %c2_39 = arith.constant 2 : index
    %c2_40 = arith.constant 2 : index
    %c0_41 = arith.constant 0 : index
    %34 = vector.load %arg9[%c2_39, %c2_40, %c0_41] : memref<10x10x32xbf16, #tpu.memory_space<vmem>>, vector<8x8x32xbf16>
    %35 = vector.shape_cast %34 : vector<8x8x32xbf16> to vector<64x32xbf16>
    %36 = tpu.concatenate %19, %21, %23, %25, %27, %29, %31, %33, %35 in 1 : vector<64x32xbf16>, vector<64x32xbf16>, vector<64x32xbf16>, vector<64x32xbf16>, vector<64x32xbf16>, vector<64x32xbf16>, vector<64x32xbf16>, vector<64x32xbf16>, vector<64x32xbf16> -> vector<64x288xbf16>
    %c0_42 = arith.constant 0 : index
    %c0_43 = arith.constant 0 : index
    %37 = vector.load %arg3[%c0_42, %c0_43] : memref<288x32xbf16, #tpu.memory_space<vmem>>, vector<288x32xbf16>
    %cst_44 = arith.constant dense<0.000000e+00> : vector<64x32xf32>
    %38 = tpu.matmul %36, %37, %cst_44 {dimension_numbers = #tpu.dot_dimension_numbers<[1], [0], [0], [1], [0, 0, 1, 1], [], []>} : vector<64x288xbf16>, vector<288x32xbf16>, vector<64x32xf32> -> vector<64x32xf32>
    %c0_45 = arith.constant 0 : index
    %c0_46 = arith.constant 0 : index
    %39 = vector.load %arg6[%c0_45, %c0_46] : memref<1x32xf32, #tpu.memory_space<vmem>>, vector<1x32xf32>
    %40 = vector.broadcast %39 : vector<1x32xf32> to vector<64x32xf32>
    %41 = arith.addf %38, %40 : vector<64x32xf32>
    %cst_47 = arith.constant 0.000000e+00 : f32
    %42 = vector.broadcast %cst_47 : f32 to vector<64x32xf32>
    %43 = arith.maximumf %41, %42 : vector<64x32xf32>
    %44 = arith.truncf %43 : vector<64x32xf32> to vector<64x32xbf16>
    %c0_48 = arith.constant 0 : index
    %c0_49 = arith.constant 0 : index
    %45 = vector.load %arg4[%c0_48, %c0_49] : memref<32x128xbf16, #tpu.memory_space<vmem>>, vector<32x128xbf16>
    %cst_50 = arith.constant dense<0.000000e+00> : vector<64x128xf32>
    %46 = tpu.matmul %44, %45, %cst_50 {dimension_numbers = #tpu.dot_dimension_numbers<[1], [0], [0], [1], [0, 0, 1, 1], [], []>} : vector<64x32xbf16>, vector<32x128xbf16>, vector<64x128xf32> -> vector<64x128xf32>
    %c0_51 = arith.constant 0 : index
    %c0_52 = arith.constant 0 : index
    %47 = vector.load %arg7[%c0_51, %c0_52] : memref<1x128xf32, #tpu.memory_space<vmem>>, vector<1x128xf32>
    %48 = vector.broadcast %47 : vector<1x128xf32> to vector<64x128xf32>
    %49 = arith.addf %46, %48 : vector<64x128xf32>
    %50 = arith.addf %49, %1 : vector<64x128xf32>
    %cst_53 = arith.constant 0.000000e+00 : f32
    %51 = vector.broadcast %cst_53 : f32 to vector<64x128xf32>
    %52 = arith.maximumf %50, %51 : vector<64x128xf32>
    %c0_54 = arith.constant 0 : index
    %c0_55 = arith.constant 0 : index
    %c0_56 = arith.constant 0 : index
    %53 = vector.load %arg8[%c0_54, %c0_55, %c0_56] : memref<1x64x128xf32, #tpu.memory_space<vmem>>, vector<1x64x128xf32>
    %54 = vector.shape_cast %53 : vector<1x64x128xf32> to vector<64x128xf32>
    %55 = vector.shape_cast %52 : vector<64x128xf32> to vector<1x64x128xf32>
    tpu.vector_store %arg8[%c0_54, %c0_55, %c0_56], %55 {strides = array<i32>} : memref<1x64x128xf32, #tpu.memory_space<vmem>>, vector<1x64x128xf32>,
    return
  }
  func.func @transform_0(%arg0: i32) -> (i32, i32, i32) {
    %c0_i32 = arith.constant 0 : i32
    %c0_i32_0 = arith.constant 0 : i32
    %c0_i32_1 = arith.constant 0 : i32
    return %arg0, %c0_i32, %c0_i32_0 : i32, i32, i32
  }
  func.func @transform_1(%arg0: i32) -> (i32, i32) {
    %c0_i32 = arith.constant 0 : i32
    %c0_i32_0 = arith.constant 0 : i32
    %c0_i32_1 = arith.constant 0 : i32
    return %c0_i32, %c0_i32_0 : i32, i32
  }
  func.func @transform_2(%arg0: i32) -> (i32, i32) {
    %c0_i32 = arith.constant 0 : i32
    %c0_i32_0 = arith.constant 0 : i32
    %c0_i32_1 = arith.constant 0 : i32
    return %c0_i32, %c0_i32_0 : i32, i32
  }
  func.func @transform_3(%arg0: i32) -> (i32, i32) {
    %c0_i32 = arith.constant 0 : i32
    %c0_i32_0 = arith.constant 0 : i32
    %c0_i32_1 = arith.constant 0 : i32
    return %c0_i32, %c0_i32_0 : i32, i32
  }
  func.func @transform_4(%arg0: i32) -> (i32, i32) {
    %c0_i32 = arith.constant 0 : i32
    %c0_i32_0 = arith.constant 0 : i32
    %c0_i32_1 = arith.constant 0 : i32
    return %c0_i32, %c0_i32_0 : i32, i32
  }
  func.func @transform_5(%arg0: i32) -> (i32, i32) {
    %c0_i32 = arith.constant 0 : i32
    %c0_i32_0 = arith.constant 0 : i32
    %c0_i32_1 = arith.constant 0 : i32
    return %c0_i32, %c0_i32_0 : i32, i32
  }
  func.func @transform_6(%arg0: i32) -> (i32, i32) {
    %c0_i32 = arith.constant 0 : i32
    %c0_i32_0 = arith.constant 0 : i32
    %c0_i32_1 = arith.constant 0 : i32
    return %c0_i32, %c0_i32_0 : i32, i32
  }
  func.func @transform_7(%arg0: i32) -> (i32, i32, i32) {
    %c0_i32 = arith.constant 0 : i32
    %c0_i32_0 = arith.constant 0 : i32
    %c0_i32_1 = arith.constant 0 : i32
    return %arg0, %c0_i32, %c0_i32_0 : i32, i32, i32
  }
}

</mosaic_0001>

<llo_original>
// kernel: tpu_custom_call.1
$region0: #{tpu_custom_call.1}
  #allocation0 [shape = 'u32[]', space=smem, size = 0x4, offset = 0x4, fixed_abs, tag = 'smem constant byte address 0x4 - core index']
  #allocation1 [shape = 'u32[72,128]{1,0:T(1,128)}', space=vmem, size = 0x9000, scoped, tag = 'internal scratch']
  #allocation2 [shape = 'bf16[10,10,32]{2,1,0:T(8,128)(2,1)}', space=vmem, size = 0xa000, scoped, tag = 'scratch operand']
  %s0 = inlined_call_operand.vmem [shape: f32[2,64,128], index: 0, kind: input, shape index: {}]
  %s1 = inlined_call_operand.vmem [shape: bf16[128,32], index: 1, kind: input, shape index: {}]
  %s2 = inlined_call_operand.vmem [shape: bf16[288,32], index: 2, kind: input, shape index: {}]
  %s3 = inlined_call_operand.vmem [shape: bf16[32,128], index: 3, kind: input, shape index: {}]
  %s4 = inlined_call_operand.vmem [shape: f32[1,32], index: 4, kind: input, shape index: {}]
  %s5 = inlined_call_operand.vmem [shape: f32[1,32], index: 5, kind: input, shape index: {}]
  %s6 = inlined_call_operand.vmem [shape: f32[1,128], index: 6, kind: input, shape index: {}]
  %s7 = inlined_call_operand.hbm [shape: f32[2,64,128], index: 7, kind: output, shape index: {}]
  %s8 = sld [smem:[#allocation0]]
  $region61: #{tpu_custom_call.1} parent=0
    _
  %s10 = ssub.s32 1, %s8
  %s11 = scalar_select 0, %s10, %s8
  $region1: #{tpu_custom_call.1} parent=0
    #allocation3 [shape = 'u8[65536]{0}', space=vmem, size = 0x10000, scoped, tag = 'output window, operand 0']
    #allocation4 [shape = 's32[2]{0}', space=sflag, size = 0x8, scoped, tag = 'scoped memory for tpu_custom_call.1']
    %12 = vsyncpa [#allocation4], 0
    %s13 = scalar_lea.sflag [#allocation4], 1
    %14 = vsyncpa %s13, 0
    loop: start=0, step=1, limit=4
    $region2: #{tpu_custom_call.1} parent=1 // loop_pre_header
      _
    $region3: #{tpu_custom_call.1} parent=1 // loop_header
      %s16 = sphi 0, %s20
      %p17 = scmp.ge.s32.totalorder %s16, 4
      %s26 = sphi 0, %s28
      %s29 = sphi 0, %s26
      %s30 = sphi 0, %s29
      %s46 = sphi 0, %s30
      %s50 = sphi 0, %s50
      %s52 = sphi 0, %s50
      %s53 = sphi 0, %s52
      %s67 = sphi 0, %s53
      %s71 = sphi 0, %s71
      %s73 = sphi 0, %s71
      %s74 = sphi 0, %s73
      %s88 = sphi 0, %s74
      %s92 = sphi 0, %s92
      %s94 = sphi 0, %s92
      %s95 = sphi 0, %s94
      %s109 = sphi 0, %s95
      %s113 = sphi 0, %s113
      %s115 = sphi 0, %s113
      %s116 = sphi 0, %s115
      %s130 = sphi 0, %s116
      %s134 = sphi 0, %s134
      %s136 = sphi 0, %s134
      %s137 = sphi 0, %s136
      %s151 = sphi 0, %s137
      %s155 = sphi 0, %s155
      %s157 = sphi 0, %s155
      %s158 = sphi 0, %s157
      %s172 = sphi 0, %s158
      %s178 = sphi 0, %s180
      %s181 = sphi 0, %s178
      %s182 = sphi 0, %s181
      %s198 = sphi 0, %s182
    $region4: #{tpu_custom_call.1} parent=1 // loop_header_branch
      %19 = sbr.rel (%p17) target = $region8
    $region5: #{tpu_custom_call.1} parent=1 // loop_body
      %s21 = ssub.s32 %s16, 1
      %s22 = ssub.s32 %s16, 2
      %s23 = sadd.s32 %s16, 1
      %s24 = ssub.s32 %s16, %s23
      %p25 = scmp.eq.s32.totalorder %s24, 0
      %s27 = sadd.s32 %s26, 1
      %s28 = scalar_select %p25, %s26, %s27
      %p31 = pneg %p25
      %p32 = scmp.eq.s32.totalorder %s16, 1
      %p33 = por %p31, %p32
      %p34 = scmp.ne.s32.totalorder %s26, %s29
      %p35 = scmp.eq.s32.totalorder %s16, 0
      %p36 = por %p34, %p35
      %p37 = scmp.ne.s32.totalorder %s26, %s29
      %p38 = scmp.eq.s32.totalorder %s21, 1
      %p39 = por %p37, %p38
      %p40 = scmp.ne.s32.totalorder %s29, %s30
      %p41 = scmp.eq.s32.totalorder %s21, 0
      %p42 = por %p40, %p41
      %p43 = scmp.ne.s32.totalorder %s29, %s30
      %p44 = scmp.eq.s32.totalorder %s22, 1
      %p45 = por %p43, %p44
      %p47 = scmp.ne.s32.totalorder %s30, %s46
      %p48 = scmp.eq.s32.totalorder %s22, 0
      %p49 = por %p47, %p48
      %s51 = sadd.s32 %s50, 1
      %p54 = scmp.eq.s32.totalorder %s16, 1
      %p55 = scmp.ne.s32.totalorder %s50, %s52
      %p56 = scmp.eq.s32.totalorder %s16, 0
      %p57 = por %p55, %p56
      %p58 = scmp.ne.s32.totalorder %s50, %s52
      %p59 = scmp.eq.s32.totalorder %s21, 1
      %p60 = por %p58, %p59
      %p61 = scmp.ne.s32.totalorder %s52, %s53
      %p62 = scmp.eq.s32.totalorder %s21, 0
      %p63 = por %p61, %p62
      %p64 = scmp.ne.s32.totalorder %s52, %s53
      %p65 = scmp.eq.s32.totalorder %s22, 1
      %p66 = por %p64, %p65
      %p68 = scmp.ne.s32.totalorder %s53, %s67
      %p69 = scmp.eq.s32.totalorder %s22, 0
      %p70 = por %p68, %p69
      %s72 = sadd.s32 %s71, 1
      %p75 = scmp.eq.s32.totalorder %s16, 1
      %p76 = scmp.ne.s32.totalorder %s71, %s73
      %p77 = scmp.eq.s32.totalorder %s16, 0
      %p78 = por %p76, %p77
      %p79 = scmp.ne.s32.totalorder %s71, %s73
      %p80 = scmp.eq.s32.totalorder %s21, 1
      %p81 = por %p79, %p80
      %p82 = scmp.ne.s32.totalorder %s73, %s74
      %p83 = scmp.eq.s32.totalorder %s21, 0
      %p84 = por %p82, %p83
      %p85 = scmp.ne.s32.totalorder %s73, %s74
      %p86 = scmp.eq.s32.totalorder %s22, 1
      %p87 = por %p85, %p86
      %p89 = scmp.ne.s32.totalorder %s74, %s88
      %p90 = scmp.eq.s32.totalorder %s22, 0
      %p91 = por %p89, %p90
      %s93 = sadd.s32 %s92, 1
      %p96 = scmp.eq.s32.totalorder %s16, 1
      %p97 = scmp.ne.s32.totalorder %s92, %s94
      %p98 = scmp.eq.s32.totalorder %s16, 0
      %p99 = por %p97, %p98
      %p100 = scmp.ne.s32.totalorder %s92, %s94
      %p101 = scmp.eq.s32.totalorder %s21, 1
      %p102 = por %p100, %p101
      %p103 = scmp.ne.s32.totalorder %s94, %s95
      %p104 = scmp.eq.s32.totalorder %s21, 0
      %p105 = por %p103, %p104
      %p106 = scmp.ne.s32.totalorder %s94, %s95
      %p107 = scmp.eq.s32.totalorder %s22, 1
      %p108 = por %p106, %p107
      %p110 = scmp.ne.s32.totalorder %s95, %s109
      %p111 = scmp.eq.s32.totalorder %s22, 0
      %p112 = por %p110, %p111
      %s114 = sadd.s32 %s113, 1
      %p117 = scmp.eq.s32.totalorder %s16, 1
      %p118 = scmp.ne.s32.totalorder %s113, %s115
      %p119 = scmp.eq.s32.totalorder %s16, 0
      %p120 = por %p118, %p119
      %p121 = scmp.ne.s32.totalorder %s113, %s115
      %p122 = scmp.eq.s32.totalorder %s21, 1
      %p123 = por %p121, %p122
      %p124 = scmp.ne.s32.totalorder %s115, %s116
      %p125 = scmp.eq.s32.totalorder %s21, 0
      %p126 = por %p124, %p125
      %p127 = scmp.ne.s32.totalorder %s115, %s116
      %p128 = scmp.eq.s32.totalorder %s22, 1
      %p129 = por %p127, %p128
      %p131 = scmp.ne.s32.totalorder %s116, %s130
      %p132 = scmp.eq.s32.totalorder %s22, 0
      %p133 = por %p131, %p132
      %s135 = sadd.s32 %s134, 1
      %p138 = scmp.eq.s32.totalorder %s16, 1
      %p139 = scmp.ne.s32.totalorder %s134, %s136
      %p140 = scmp.eq.s32.totalorder %s16, 0
      %p141 = por %p139, %p140
      %p142 = scmp.ne.s32.totalorder %s134, %s136
      %p143 = scmp.eq.s32.totalorder %s21, 1
      %p144 = por %p142, %p143
      %p145 = scmp.ne.s32.totalorder %s136, %s137
      %p146 = scmp.eq.s32.totalorder %s21, 0
      %p147 = por %p145, %p146
      %p148 = scmp.ne.s32.totalorder %s136, %s137
      %p149 = scmp.eq.s32.totalorder %s22, 1
      %p150 = por %p148, %p149
      %p152 = scmp.ne.s32.totalorder %s137, %s151
      %p153 = scmp.eq.s32.totalorder %s22, 0
      %p154 = por %p152, %p153
      %s156 = sadd.s32 %s155, 1
      %p159 = scmp.eq.s32.totalorder %s16, 1
      %p160 = scmp.ne.s32.totalorder %s155, %s157
      %p161 = scmp.eq.s32.totalorder %s16, 0
      %p162 = por %p160, %p161
      %p163 = scmp.ne.s32.totalorder %s155, %s157
      %p164 = scmp.eq.s32.totalorder %s21, 1
      %p165 = por %p163, %p164
      %p166 = scmp.ne.s32.totalorder %s157, %s158
      %p167 = scmp.eq.s32.totalorder %s21, 0
      %p168 = por %p166, %p167
      %p169 = scmp.ne.s32.totalorder %s157, %s158
      %p170 = scmp.eq.s32.totalorder %s22, 1
      %p171 = por %p169, %p170
      %p173 = scmp.ne.s32.totalorder %s158, %s172
      %p174 = scmp.eq.s32.totalorder %s22, 0
      %p175 = por %p173, %p174
      %s176 = ssub.s32 %s16, %s23
      %p177 = scmp.eq.s32.totalorder %s176, 0
      %s179 = sadd.s32 %s178, 1
      %s180 = scalar_select %p177, %s178, %s179
      %p183 = pneg %p177
      %p184 = scmp.eq.s32.totalorder %s16, 1
      %p185 = por %p183, %p184
      %p186 = scmp.ne.s32.totalorder %s178, %s181
      %p187 = scmp.eq.s32.totalorder %s16, 0
      %p188 = por %p186, %p187
      %p189 = scmp.ne.s32.totalorder %s178, %s181
      %p190 = scmp.eq.s32.totalorder %s21, 1
      %p191 = por %p189, %p190
      %p192 = scmp.ne.s32.totalorder %s181, %s182
      %p193 = scmp.eq.s32.totalorder %s21, 0
      %p194 = por %p192, %p193
      %p195 = scmp.ne.s32.totalorder %s181, %s182
      %p196 = scmp.eq.s32.totalorder %s22, 1
      %p197 = por %p195, %p196
      %p199 = scmp.ne.s32.totalorder %s182, %s198
      %p200 = scmp.eq.s32.totalorder %s22, 0
      %p201 = por %p199, %p200
      %p202 = scmp.le.s32.totalorder 1, %s16
      %p203 = scmp.lt.s32.totalorder %s16, 3
      %p204 = pnand %p202, %p203
      %p205 = pneg %p204
      // Predicated region
      $region9: #{tpu_custom_call.1} parent=5 // pred_check
        _
      $region10: #{tpu_custom_call.1} parent=5 // pred_check_branch
        %207 = sbr.rel (%p204) target = $region12
      $region11: #{tpu_custom_call.1} parent=5 // pred_region
        %s208 = ssub.s32 %s16, 1
        // Predicated region
        $region13: #{tpu_custom_call.1} parent=11 // pred_check
          %p209 = pneg %p63
        $region14: #{tpu_custom_call.1} parent=11 // pred_check_branch
          %211 = sbr.rel (%p209) target = $region16
        $region15: #{tpu_custom_call.1} parent=11 // pred_region
          _
        $region16: #{tpu_custom_call.1} parent=11 // pred_fallthru
          _
        // Predicated region
        $region17: #{tpu_custom_call.1} parent=11 // pred_check
          %p212 = pneg %p84
        $region18: #{tpu_custom_call.1} parent=11 // pred_check_branch
          %214 = sbr.rel (%p212) target = $region20
        $region19: #{tpu_custom_call.1} parent=11 // pred_region
          _
        $region20: #{tpu_custom_call.1} parent=11 // pred_fallthru
          _
        // Predicated region
        $region21: #{tpu_custom_call.1} parent=11 // pred_check
          %p215 = pneg %p105
        $region22: #{tpu_custom_call.1} parent=11 // pred_check_branch
          %217 = sbr.rel (%p215) target = $region24
        $region23: #{tpu_custom_call.1} parent=11 // pred_region
          _
        $region24: #{tpu_custom_call.1} parent=11 // pred_fallthru
          _
        // Predicated region
        $region25: #{tpu_custom_call.1} parent=11 // pred_check
          %p218 = pneg %p126
        $region26: #{tpu_custom_call.1} parent=11 // pred_check_branch
          %220 = sbr.rel (%p218) target = $region28
        $region27: #{tpu_custom_call.1} parent=11 // pred_region
          _
        $region28: #{tpu_custom_call.1} parent=11 // pred_fallthru
          _
        // Predicated region
        $region29: #{tpu_custom_call.1} parent=11 // pred_check
          %p221 = pneg %p147
        $region30: #{tpu_custom_call.1} parent=11 // pred_check_branch
          %223 = sbr.rel (%p221) target = $region32
        $region31: #{tpu_custom_call.1} parent=11 // pred_region
          _
        $region32: #{tpu_custom_call.1} parent=11 // pred_fallthru
          _
        // Predicated region
        $region33: #{tpu_custom_call.1} parent=11 // pred_check
          %p224 = pneg %p168
        $region34: #{tpu_custom_call.1} parent=11 // pred_check_branch
          %226 = sbr.rel (%p224) target = $region36
        $region35: #{tpu_custom_call.1} parent=11 // pred_region
          _
        $region36: #{tpu_custom_call.1} parent=11 // pred_fallthru
          _
      $region12: #{tpu_custom_call.1} parent=5 // pred_fallthru
        _
      %p227 = scmp.lt.s32.totalorder %s16, 2
      // Predicated region
      $region37: #{tpu_custom_call.1} parent=5 // pred_check
        %p228 = pneg %p227
      $region38: #{tpu_custom_call.1} parent=5 // pred_check_branch
        %230 = sbr.rel (%p228) target = $region40
      $region39: #{tpu_custom_call.1} parent=5 // pred_region
        // Predicated region
        $region41: #{tpu_custom_call.1} parent=39 // pred_check
          %p231 = pneg %p36
        $region42: #{tpu_custom_call.1} parent=39 // pred_check_branch
          %233 = sbr.rel (%p231) target = $region44
        $region43: #{tpu_custom_call.1} parent=39 // pred_region
          %p234 = scmp.lt.s32.totalorder %s16, 1
          %s235 = scalar_select %p234, %s16, 1
          %s236 = smul.addr %s235, 8
          %s237 = smul.addr %s236, 8
          %s238 = scalar_lea.vmem %s0, %s237
        $region44: #{tpu_custom_call.1} parent=39 // pred_fallthru
          _
      $region40: #{tpu_custom_call.1} parent=5 // pred_fallthru
        _
      %p239 = scmp.le.s32.totalorder 1, %s16
      %p240 = scmp.lt.s32.totalorder %s16, 3
      %p241 = pnand %p239, %p240
      %p242 = pneg %p241
      // Predicated region
      $region45: #{tpu_custom_call.1} parent=5 // pred_check
        _
      $region46: #{tpu_custom_call.1} parent=5 // pred_check_branch
        %244 = sbr.rel (%p241) target = $region48
      $region47: #{tpu_custom_call.1} parent=5 // pred_region
        %s245 = ssub.s32 %s16, 1
        %p246 = scmp.lt.s32.totalorder %s21, 1
        %s247 = scalar_select %p246, %s21, 1
        %s248 = smul.addr %s247, 8
        %s249 = smul.addr %s248, 8
        %s250 = scalar_lea.vmem %s0, %s249
        %p251 = pneg %p42
        %p252 = pneg %p39
        %p253 = pneg %p63
        %p254 = pneg %p60
        %p255 = pneg %p84
        %p256 = pneg %p81
        %p257 = pneg %p105
        %p258 = pneg %p102
        %p259 = pneg %p126
        %p260 = pneg %p123
        %p261 = pneg %p147
        %p262 = pneg %p144
        %p263 = pneg %p168
        %p264 = pneg %p165
        %p265 = pneg %p194
        %p266 = pneg %p191
        %s267 = sand.u32 %s181, 1
        %s268 = scalar_lea.sflag [#allocation4], %s267
        %s269 = sand.u32 %s181, 1
        %s270 = smul.addr %s269, 64
        %s271 = scalar_lea.vmem [#allocation3], %s270
        %p272 = scmp.lt.s32.totalorder %s21, 1
        %s273 = scalar_select %p272, %s21, 1
        %s274 = smul.addr %s273, 8
        %s275 = smul.addr %s274, 8
        %s276 = scalar_lea.vmem %s0, %s275
        %v278 = vld [vmem:[%s276] sm:$0xff]
        %v279 = vld [vmem:[%s276 + $0x8] sm:$0xff]
        %v280 = vld [vmem:[%s276 + $0x10] sm:$0xff]
        %v281 = vld [vmem:[%s276 + $0x18] sm:$0xff]
        %v282 = vld [vmem:[%s276 + $0x20] sm:$0xff]
        %v283 = vld [vmem:[%s276 + $0x28] sm:$0xff]
        %v284 = vld [vmem:[%s276 + $0x30] sm:$0xff]
        %v285 = vld [vmem:[%s276 + $0x38] sm:$0xff]
        %v286 = vpack.c.bf16 %v279, %v278
        %v287 = vpack.c.bf16 %v281, %v280
        %v288 = vpack.c.bf16 %v283, %v282
        %v289 = vpack.c.bf16 %v285, %v284
        %v290 = vld [vmem:[%s1] sm:$0xf]
        %v291 = vld [vmem:[%s1 + $0x4] sm:$0xf]
        %v292 = vld [vmem:[%s1 + $0x8] sm:$0xf]
        %v293 = vld [vmem:[%s1 + $0xc] sm:$0xf]
        %v294 = vld [vmem:[%s1 + $0x10] sm:$0xf]
        %v295 = vld [vmem:[%s1 + $0x14] sm:$0xf]
        %v296 = vld [vmem:[%s1 + $0x18] sm:$0xf]
        %v297 = vld [vmem:[%s1 + $0x1c] sm:$0xf]
        %v298 = vld [vmem:[%s1 + $0x20] sm:$0xf]
        %v299 = vld [vmem:[%s1 + $0x24] sm:$0xf]
        %v300 = vld [vmem:[%s1 + $0x28] sm:$0xf]
        %v301 = vld [vmem:[%s1 + $0x2c] sm:$0xf]
        %v302 = vld [vmem:[%s1 + $0x30] sm:$0xf]
        %v303 = vld [vmem:[%s1 + $0x34] sm:$0xf]
        %v304 = vld [vmem:[%s1 + $0x38] sm:$0xf]
        %v305 = vld [vmem:[%s1 + $0x3c] sm:$0xf]
        %v306 = vld [vmem:[%s4] sm:$0x1]
        %v308 = vperm.slane %v306, 0
        %v326 = vunpack.c.l.b16 %v290
        %v327 = vunpack.c.l.b16 %v291
        %v328 = vunpack.c.l.b16 %v292
        %v329 = vunpack.c.l.b16 %v293
        %v330 = vunpack.c.l.b16 %v294
        %v331 = vunpack.c.l.b16 %v295
        %v332 = vunpack.c.l.b16 %v296
        %v333 = vunpack.c.l.b16 %v297
        %v334 = vunpack.c.l.b16 %v298
        %v335 = vunpack.c.l.b16 %v299
        %v336 = vunpack.c.l.b16 %v300
        %v337 = vunpack.c.l.b16 %v301
        %v338 = vunpack.c.l.b16 %v302
        %v339 = vunpack.c.l.b16 %v303
        %v340 = vunpack.c.l.b16 %v304
        %v341 = vunpack.c.l.b16 %v305
        %v342 = vpack.c.b16 %v327, %v326
        %v343 = vpack.c.b16 %v329, %v328
        %v344 = vpack.c.b16 %v331, %v330
        %v345 = vpack.c.b16 %v333, %v332
        %v346 = vpack.c.b16 %v335, %v334
        %v347 = vpack.c.b16 %v337, %v336
        %v348 = vpack.c.b16 %v339, %v338
        %v349 = vpack.c.b16 %v341, %v340
        %358 = vmatpush.bf16.msra.mxu0 %v349
        %359 = vmatpush.bf16.msra.mxu0 %v348
        %360 = vmatpush.bf16.msra.mxu0 %v347
        %361 = vmatpush.bf16.msra.mxu0 %v346
        %362 = vmatpush.bf16.msra.mxu0 %v345
        %363 = vmatpush.bf16.msra.mxu0 %v344
        %364 = vmatpush.bf16.msra.mxu0 %v343
        %365 = vmatpush.bf16.msra.mxu0 %v342
        %366 = vmatmul.bf16.gmra.mxu0 %v286
        %v367 = vpop.f32.mrf.mxu0
        %v368 = vadd.f32 %v308, %v367
        %v369 = vpop.f32.mrf.mxu0
        %v370 = vadd.f32 %v308, %v369
        %371 = vmatmul.bf16.gmra.mxu0 %v287
        %v372 = vpop.f32.mrf.mxu0
        %v373 = vadd.f32 %v308, %v372
        %v374 = vpop.f32.mrf.mxu0
        %v375 = vadd.f32 %v308, %v374
        %376 = vmatmul.bf16.gmra.mxu0 %v288
        %v377 = vpop.f32.mrf.mxu0
        %v378 = vadd.f32 %v308, %v377
        %v379 = vpop.f32.mrf.mxu0
        %v380 = vadd.f32 %v308, %v379
        %381 = vmatmul.bf16.gmra.mxu0 %v289
        %v382 = vpop.f32.mrf.mxu0
        %v383 = vadd.f32 %v308, %v382
        %v384 = vpop.f32.mrf.mxu0
        %v385 = vadd.f32 %v308, %v384
        %386 = vdwg.mxu0
        %v387 = vmax.f32 %v368, 0.0
        %v388 = vmax.f32 %v370, 0.0
        %v389 = vmax.f32 %v373, 0.0
        %v390 = vmax.f32 %v375, 0.0
        %v391 = vmax.f32 %v378, 0.0
        %v392 = vmax.f32 %v380, 0.0
        %v393 = vmax.f32 %v383, 0.0
        %v394 = vmax.f32 %v385, 0.0
        %vm395 = vcmask 257024
        %396 = vst.msk [vmem:[#allocation2] sm:$0xf] %vm395, 0
        %vm397 = vcmask 253952
        %398 = vst.msk [vmem:[#allocation2 + $0x4] sm:$0x1] %vm397, 0
        %s399 = scalar_lea.vmem [#allocation2], 72
        %400 = vst.msk [vmem:[%s399] sm:$0xf] %vm395, 0
        %401 = vst.msk [vmem:[%s399 + $0x4] sm:$0x1] %vm397, 0
        %v410 = vrot.slane %v387, 7
        %v411 = vrot.slane %v388, 7
        %v412 = vrot.slane %v389, 7
        %v413 = vrot.slane %v390, 7
        %v414 = vrot.slane %v391, 7
        %v415 = vrot.slane %v392, 7
        %v416 = vrot.slane %v393, 7
        %v417 = vrot.slane %v394, 7
        %vm426 = vcmask 1040384
        %v427 = vsel %vm426, 0.0, %v410
        %v428 = vsel %vm426, 0.0, %v411
        %v429 = vsel %vm426, 0.0, %v412
        %v430 = vsel %vm426, 0.0, %v413
        %v431 = vsel %vm426, 0.0, %v414
        %v432 = vsel %vm426, 0.0, %v415
        %v433 = vsel %vm426, 0.0, %v416
        %v434 = vsel %vm426, 0.0, %v417
        %v435 = vsel %vm426, %v410, 0.0
        %v436 = vsel %vm426, %v411, 0.0
        %v437 = vsel %vm426, %v412, 0.0
        %v438 = vsel %vm426, %v413, 0.0
        %v439 = vsel %vm426, %v414, 0.0
        %v440 = vsel %vm426, %v415, 0.0
        %v441 = vsel %vm426, %v416, 0.0
        %v442 = vsel %vm426, %v417, 0.0
        %v443 = vpack.c.bf16 %v427, %v427
        %v444 = vpack.c.bf16 %v435, %v435
        %v445 = vpack.c.bf16 %v428, %v428
        %v446 = vpack.c.bf16 %v436, %v436
        %v447 = vpack.c.bf16 %v429, %v429
        %v448 = vpack.c.bf16 %v437, %v437
        %v449 = vpack.c.bf16 %v430, %v430
        %v450 = vpack.c.bf16 %v438, %v438
        %v451 = vpack.c.bf16 %v431, %v431
        %v452 = vpack.c.bf16 %v439, %v439
        %v453 = vpack.c.bf16 %v432, %v432
        %v454 = vpack.c.bf16 %v440, %v440
        %v455 = vpack.c.bf16 %v433, %v433
        %v456 = vpack.c.bf16 %v441, %v441
        %v457 = vpack.c.bf16 %v434, %v434
        %v458 = vpack.c.bf16 %v442, %v442
        %s459 = scalar_lea.vmem [#allocation2], 8
        %460 = vst.msk [vmem:[%s459] sm:$0xf] %vm395, %v443
        %461 = vst.msk [vmem:[%s459 + $0x4] sm:$0x1] %vm397, %v444
        %462 = vst.msk [vmem:[%s459 + $0x8] sm:$0xf] %vm395, %v445
        %463 = vst.msk [vmem:[%s459 + $0xc] sm:$0x1] %vm397, %v446
        %464 = vst.msk [vmem:[%s459 + $0x10] sm:$0xf] %vm395, %v447
        %465 = vst.msk [vmem:[%s459 + $0x14] sm:$0x1] %vm397, %v448
        %466 = vst.msk [vmem:[%s459 + $0x18] sm:$0xf] %vm395, %v449
        %467 = vst.msk [vmem:[%s459 + $0x1c] sm:$0x1] %vm397, %v450
        %468 = vst.msk [vmem:[%s459 + $0x20] sm:$0xf] %vm395, %v451
        %469 = vst.msk [vmem:[%s459 + $0x24] sm:$0x1] %vm397, %v452
        %470 = vst.msk [vmem:[%s459 + $0x28] sm:$0xf] %vm395, %v453
        %471 = vst.msk [vmem:[%s459 + $0x2c] sm:$0x1] %vm397, %v454
        %472 = vst.msk [vmem:[%s459 + $0x30] sm:$0xf] %vm395, %v455
        %473 = vst.msk [vmem:[%s459 + $0x34] sm:$0x1] %vm397, %v456
        %474 = vst.msk [vmem:[%s459 + $0x38] sm:$0xf] %vm395, %v457
        %475 = vst.msk [vmem:[%s459 + $0x3c] sm:$0x1] %vm397, %v458
        %v476 = vld [vmem:[#allocation2] sm:$0xf]
        %v477 = vld [vmem:[#allocation2 + $0x8] sm:$0xf]
        %v478 = vld [vmem:[#allocation2 + $0x10] sm:$0xf]
        %v479 = vld [vmem:[#allocation2 + $0x18] sm:$0xf]
        %v480 = vld [vmem:[#allocation2 + $0x20] sm:$0xf]
        %v481 = vld [vmem:[#allocation2 + $0x28] sm:$0xf]
        %v482 = vld [vmem:[#allocation2 + $0x30] sm:$0xf]
        %v483 = vld [vmem:[#allocation2 + $0x38] sm:$0xf]
        %v484 = vld [vmem:[#allocation2 + $0x4] sm:$0x1]
        %v485 = vld [vmem:[#allocation2 + $0xc] sm:$0x1]
        %v486 = vld [vmem:[#allocation2 + $0x14] sm:$0x1]
        %v487 = vld [vmem:[#allocation2 + $0x1c] sm:$0x1]
        %v488 = vld [vmem:[#allocation2 + $0x24] sm:$0x1]
        %v489 = vld [vmem:[#allocation2 + $0x2c] sm:$0x1]
        %v490 = vld [vmem:[#allocation2 + $0x34] sm:$0x1]
        %v491 = vld [vmem:[#allocation2 + $0x3c] sm:$0x1]
        %vm492 = vsmask.f32 3328
        %vm493 = vsmask.f32 7440
        %vm494 = vmor %vm492, %vm493
        %v496 = vshrl.u32 %v476, 16
        %v498 = vrot.slane %v496, 4
        %v499 = vshll.u32 %v476, 16
        %v501 = vrot.slane %v499, 5
        %v502 = vor.u32 %v498, %v501
        %v503 = vrot.slane %v502, 4
        %v505 = vshll.u32 %v484, 16
        %v507 = vrot.slane %v505, 5
        %v508 = vsel %vm494, %v503, %v507
        %v510 = vshrl.u32 %v477, 16
        %v512 = vrot.slane %v510, 4
        %v513 = vshll.u32 %v477, 16
        %v515 = vrot.slane %v513, 5
        %v516 = vor.u32 %v512, %v515
        %v517 = vrot.slane %v516, 4
        %v519 = vshll.u32 %v485, 16
        %v521 = vrot.slane %v519, 5
        %v522 = vsel %vm494, %v517, %v521
        %v524 = vshrl.u32 %v478, 16
        %v526 = vrot.slane %v524, 4
        %v527 = vshll.u32 %v478, 16
        %v529 = vrot.slane %v527, 5
        %v530 = vor.u32 %v526, %v529
        %v531 = vrot.slane %v530, 4
        %v533 = vshll.u32 %v486, 16
        %v535 = vrot.slane %v533, 5
        %v536 = vsel %vm494, %v531, %v535
        %v538 = vshrl.u32 %v479, 16
        %v540 = vrot.slane %v538, 4
        %v541 = vshll.u32 %v479, 16
        %v543 = vrot.slane %v541, 5
        %v544 = vor.u32 %v540, %v543
        %v545 = vrot.slane %v544, 4
        %v547 = vshll.u32 %v487, 16
        %v549 = vrot.slane %v547, 5
        %v550 = vsel %vm494, %v545, %v549
        %v552 = vshrl.u32 %v480, 16
        %v554 = vrot.slane %v552, 4
        %v555 = vshll.u32 %v480, 16
        %v557 = vrot.slane %v555, 5
        %v558 = vor.u32 %v554, %v557
        %v559 = vrot.slane %v558, 4
        %v561 = vshll.u32 %v488, 16
        %v563 = vrot.slane %v561, 5
        %v564 = vsel %vm494, %v559, %v563
        %v566 = vshrl.u32 %v481, 16
        %v568 = vrot.slane %v566, 4
        %v569 = vshll.u32 %v481, 16
        %v571 = vrot.slane %v569, 5
        %v572 = vor.u32 %v568, %v571
        %v573 = vrot.slane %v572, 4
        %v575 = vshll.u32 %v489, 16
        %v577 = vrot.slane %v575, 5
        %v578 = vsel %vm494, %v573, %v577
        %v580 = vshrl.u32 %v482, 16
        %v582 = vrot.slane %v580, 4
        %v583 = vshll.u32 %v482, 16
        %v585 = vrot.slane %v583, 5
        %v586 = vor.u32 %v582, %v585
        %v587 = vrot.slane %v586, 4
        %v589 = vshll.u32 %v490, 16
        %v591 = vrot.slane %v589, 5
        %v592 = vsel %vm494, %v587, %v591
        %v594 = vshrl.u32 %v483, 16
        %v596 = vrot.slane %v594, 4
        %v597 = vshll.u32 %v483, 16
        %v599 = vrot.slane %v597, 5
        %v600 = vor.u32 %v596, %v599
        %v601 = vrot.slane %v600, 4
        %v603 = vshll.u32 %v491, 16
        %v605 = vrot.slane %v603, 5
        %v606 = vsel %vm494, %v601, %v605
        %v607 = vld [vmem:[#allocation2] sm:$0xe]
        %v608 = vld [vmem:[#allocation2 + $0x8] sm:$0xe]
        %v609 = vld [vmem:[#allocation2 + $0x10] sm:$0xe]
        %v610 = vld [vmem:[#allocation2 + $0x18] sm:$0xe]
        %v611 = vld [vmem:[#allocation2 + $0x20] sm:$0xe]
        %v612 = vld [vmem:[#allocation2 + $0x28] sm:$0xe]
        %v613 = vld [vmem:[#allocation2 + $0x30] sm:$0xe]
        %v614 = vld [vmem:[#allocation2 + $0x38] sm:$0xe]
        %vm631 = vcmask 1042432
        %vm632 = vcmask 1046532
        %vm633 = vmor %vm631, %vm632
        %v634 = vrot.slane %v607, 5
        %v635 = vrot.slane %v634, 4
        %v636 = vrot.slane %v484, 5
        %v637 = vsel %vm633, %v635, %v636
        %v638 = vrot.slane %v608, 5
        %v639 = vrot.slane %v638, 4
        %v640 = vrot.slane %v485, 5
        %v641 = vsel %vm633, %v639, %v640
        %v642 = vrot.slane %v609, 5
        %v643 = vrot.slane %v642, 4
        %v644 = vrot.slane %v486, 5
        %v645 = vsel %vm633, %v643, %v644
        %v646 = vrot.slane %v610, 5
        %v647 = vrot.slane %v646, 4
        %v648 = vrot.slane %v487, 5
        %v649 = vsel %vm633, %v647, %v648
        %v650 = vrot.slane %v611, 5
        %v651 = vrot.slane %v650, 4
        %v652 = vrot.slane %v488, 5
        %v653 = vsel %vm633, %v651, %v652
        %v654 = vrot.slane %v612, 5
        %v655 = vrot.slane %v654, 4
        %v656 = vrot.slane %v489, 5
        %v657 = vsel %vm633, %v655, %v656
        %v658 = vrot.slane %v613, 5
        %v659 = vrot.slane %v658, 4
        %v660 = vrot.slane %v490, 5
        %v661 = vsel %vm633, %v659, %v660
        %v662 = vrot.slane %v614, 5
        %v663 = vrot.slane %v662, 4
        %v664 = vrot.slane %v491, 5
        %v665 = vsel %vm633, %v663, %v664
        %v666 = vld [vmem:[%s459] sm:$0xf]
        %v667 = vld [vmem:[%s459 + $0x8] sm:$0xf]
        %v668 = vld [vmem:[%s459 + $0x10] sm:$0xf]
        %v669 = vld [vmem:[%s459 + $0x18] sm:$0xf]
        %v670 = vld [vmem:[%s459 + $0x20] sm:$0xf]
        %v671 = vld [vmem:[%s459 + $0x28] sm:$0xf]
        %v672 = vld [vmem:[%s459 + $0x30] sm:$0xf]
        %v673 = vld [vmem:[%s459 + $0x38] sm:$0xf]
        %v674 = vld [vmem:[%s459 + $0x4] sm:$0x1]
        %v675 = vld [vmem:[%s459 + $0xc] sm:$0x1]
        %v676 = vld [vmem:[%s459 + $0x14] sm:$0x1]
        %v677 = vld [vmem:[%s459 + $0x1c] sm:$0x1]
        %v678 = vld [vmem:[%s459 + $0x24] sm:$0x1]
        %v679 = vld [vmem:[%s459 + $0x2c] sm:$0x1]
        %v680 = vld [vmem:[%s459 + $0x34] sm:$0x1]
        %v681 = vld [vmem:[%s459 + $0x3c] sm:$0x1]
        %v683 = vshrl.u32 %v666, 16
        %v685 = vrot.slane %v683, 4
        %v686 = vshll.u32 %v666, 16
        %v688 = vrot.slane %v686, 5
        %v689 = vor.u32 %v685, %v688
        %v690 = vrot.slane %v689, 4
        %v692 = vshll.u32 %v674, 16
        %v694 = vrot.slane %v692, 5
        %v695 = vsel %vm494, %v690, %v694
        %v697 = vshrl.u32 %v667, 16
        %v699 = vrot.slane %v697, 4
        %v700 = vshll.u32 %v667, 16
        %v702 = vrot.slane %v700, 5
        %v703 = vor.u32 %v699, %v702
        %v704 = vrot.slane %v703, 4
        %v706 = vshll.u32 %v675, 16
        %v708 = vrot.slane %v706, 5
        %v709 = vsel %vm494, %v704, %v708
        %v711 = vshrl.u32 %v668, 16
        %v713 = vrot.slane %v711, 4
        %v714 = vshll.u32 %v668, 16
        %v716 = vrot.slane %v714, 5
        %v717 = vor.u32 %v713, %v716
        %v718 = vrot.slane %v717, 4
        %v720 = vshll.u32 %v676, 16
        %v722 = vrot.slane %v720, 5
        %v723 = vsel %vm494, %v718, %v722
        %v725 = vshrl.u32 %v669, 16
        %v727 = vrot.slane %v725, 4
        %v728 = vshll.u32 %v669, 16
        %v730 = vrot.slane %v728, 5
        %v731 = vor.u32 %v727, %v730
        %v732 = vrot.slane %v731, 4
        %v734 = vshll.u32 %v677, 16
        %v736 = vrot.slane %v734, 5
        %v737 = vsel %vm494, %v732, %v736
        %v739 = vshrl.u32 %v670, 16
        %v741 = vrot.slane %v739, 4
        %v742 = vshll.u32 %v670, 16
        %v744 = vrot.slane %v742, 5
        %v745 = vor.u32 %v741, %v744
        %v746 = vrot.slane %v745, 4
        %v748 = vshll.u32 %v678, 16
        %v750 = vrot.slane %v748, 5
        %v751 = vsel %vm494, %v746, %v750
        %v753 = vshrl.u32 %v671, 16
        %v755 = vrot.slane %v753, 4
        %v756 = vshll.u32 %v671, 16
        %v758 = vrot.slane %v756, 5
        %v759 = vor.u32 %v755, %v758
        %v760 = vrot.slane %v759, 4
        %v762 = vshll.u32 %v679, 16
        %v764 = vrot.slane %v762, 5
        %v765 = vsel %vm494, %v760, %v764
        %v767 = vshrl.u32 %v672, 16
        %v769 = vrot.slane %v767, 4
        %v770 = vshll.u32 %v672, 16
        %v772 = vrot.slane %v770, 5
        %v773 = vor.u32 %v769, %v772
        %v774 = vrot.slane %v773, 4
        %v776 = vshll.u32 %v680, 16
        %v778 = vrot.slane %v776, 5
        %v779 = vsel %vm494, %v774, %v778
        %v781 = vshrl.u32 %v673, 16
        %v783 = vrot.slane %v781, 4
        %v784 = vshll.u32 %v673, 16
        %v786 = vrot.slane %v784, 5
        %v787 = vor.u32 %v783, %v786
        %v788 = vrot.slane %v787, 4
        %v790 = vshll.u32 %v681, 16
        %v792 = vrot.slane %v790, 5
        %v793 = vsel %vm494, %v788, %v792
        %v794 = vld [vmem:[%s459] sm:$0xe]
        %v795 = vld [vmem:[%s459 + $0x8] sm:$0xe]
        %v796 = vld [vmem:[%s459 + $0x10] sm:$0xe]
        %v797 = vld [vmem:[%s459 + $0x18] sm:$0xe]
        %v798 = vld [vmem:[%s459 + $0x20] sm:$0xe]
        %v799 = vld [vmem:[%s459 + $0x28] sm:$0xe]
        %v800 = vld [vmem:[%s459 + $0x30] sm:$0xe]
        %v801 = vld [vmem:[%s459 + $0x38] sm:$0xe]
        %v818 = vrot.slane %v794, 5
        %v819 = vrot.slane %v818, 4
        %v820 = vrot.slane %v674, 5
        %v821 = vsel %vm633, %v819, %v820
        %v822 = vrot.slane %v795, 5
        %v823 = vrot.slane %v822, 4
        %v824 = vrot.slane %v675, 5
        %v825 = vsel %vm633, %v823, %v824
        %v826 = vrot.slane %v796, 5
        %v827 = vrot.slane %v826, 4
        %v828 = vrot.slane %v676, 5
        %v829 = vsel %vm633, %v827, %v828
        %v830 = vrot.slane %v797, 5
        %v831 = vrot.slane %v830, 4
        %v832 = vrot.slane %v677, 5
        %v833 = vsel %vm633, %v831, %v832
        %v834 = vrot.slane %v798, 5
        %v835 = vrot.slane %v834, 4
        %v836 = vrot.slane %v678, 5
        %v837 = vsel %vm633, %v835, %v836
        %v838 = vrot.slane %v799, 5
        %v839 = vrot.slane %v838, 4
        %v840 = vrot.slane %v679, 5
        %v841 = vsel %vm633, %v839, %v840
        %v842 = vrot.slane %v800, 5
        %v843 = vrot.slane %v842, 4
        %v844 = vrot.slane %v680, 5
        %v845 = vsel %vm633, %v843, %v844
        %v846 = vrot.slane %v801, 5
        %v847 = vrot.slane %v846, 4
        %v848 = vrot.slane %v681, 5
        %v849 = vsel %vm633, %v847, %v848
        %s850 = scalar_lea.vmem [#allocation2], 16
        %v851 = vld [vmem:[%s850] sm:$0xf]
        %v852 = vld [vmem:[%s850 + $0x8] sm:$0xf]
        %v853 = vld [vmem:[%s850 + $0x10] sm:$0xf]
        %v854 = vld [vmem:[%s850 + $0x18] sm:$0xf]
        %v855 = vld [vmem:[%s850 + $0x20] sm:$0xf]
        %v856 = vld [vmem:[%s850 + $0x28] sm:$0xf]
        %v857 = vld [vmem:[%s850 + $0x30] sm:$0xf]
        %v858 = vld [vmem:[%s850 + $0x38] sm:$0xf]
        %v859 = vld [vmem:[%s850 + $0x4] sm:$0x1]
        %v860 = vld [vmem:[%s850 + $0xc] sm:$0x1]
        %v861 = vld [vmem:[%s850 + $0x14] sm:$0x1]
        %v862 = vld [vmem:[%s850 + $0x1c] sm:$0x1]
        %v863 = vld [vmem:[%s850 + $0x24] sm:$0x1]
        %v864 = vld [vmem:[%s850 + $0x2c] sm:$0x1]
        %v865 = vld [vmem:[%s850 + $0x34] sm:$0x1]
        %v866 = vld [vmem:[%s850 + $0x3c] sm:$0x1]
        %v868 = vshrl.u32 %v851, 16
        %v870 = vrot.slane %v868, 4
        %v871 = vshll.u32 %v851, 16
        %v873 = vrot.slane %v871, 5
        %v874 = vor.u32 %v870, %v873
        %v875 = vrot.slane %v874, 4
        %v877 = vshll.u32 %v859, 16
        %v879 = vrot.slane %v877, 5
        %v880 = vsel %vm494, %v875, %v879
        %v882 = vshrl.u32 %v852, 16
        %v884 = vrot.slane %v882, 4
        %v885 = vshll.u32 %v852, 16
        %v887 = vrot.slane %v885, 5
        %v888 = vor.u32 %v884, %v887
        %v889 = vrot.slane %v888, 4
        %v891 = vshll.u32 %v860, 16
        %v893 = vrot.slane %v891, 5
        %v894 = vsel %vm494, %v889, %v893
        %v896 = vshrl.u32 %v853, 16
        %v898 = vrot.slane %v896, 4
        %v899 = vshll.u32 %v853, 16
        %v901 = vrot.slane %v899, 5
        %v902 = vor.u32 %v898, %v901
        %v903 = vrot.slane %v902, 4
        %v905 = vshll.u32 %v861, 16
        %v907 = vrot.slane %v905, 5
        %v908 = vsel %vm494, %v903, %v907
        %v910 = vshrl.u32 %v854, 16
        %v912 = vrot.slane %v910, 4
        %v913 = vshll.u32 %v854, 16
        %v915 = vrot.slane %v913, 5
        %v916 = vor.u32 %v912, %v915
        %v917 = vrot.slane %v916, 4
        %v919 = vshll.u32 %v862, 16
        %v921 = vrot.slane %v919, 5
        %v922 = vsel %vm494, %v917, %v921
        %v924 = vshrl.u32 %v855, 16
        %v926 = vrot.slane %v924, 4
        %v927 = vshll.u32 %v855, 16
        %v929 = vrot.slane %v927, 5
        %v930 = vor.u32 %v926, %v929
        %v931 = vrot.slane %v930, 4
        %v933 = vshll.u32 %v863, 16
        %v935 = vrot.slane %v933, 5
        %v936 = vsel %vm494, %v931, %v935
        %v938 = vshrl.u32 %v856, 16
        %v940 = vrot.slane %v938, 4
        %v941 = vshll.u32 %v856, 16
        %v943 = vrot.slane %v941, 5
        %v944 = vor.u32 %v940, %v943
        %v945 = vrot.slane %v944, 4
        %v947 = vshll.u32 %v864, 16
        %v949 = vrot.slane %v947, 5
        %v950 = vsel %vm494, %v945, %v949
        %v952 = vshrl.u32 %v857, 16
        %v954 = vrot.slane %v952, 4
        %v955 = vshll.u32 %v857, 16
        %v957 = vrot.slane %v955, 5
        %v958 = vor.u32 %v954, %v957
        %v959 = vrot.slane %v958, 4
        %v961 = vshll.u32 %v865, 16
        %v963 = vrot.slane %v961, 5
        %v964 = vsel %vm494, %v959, %v963
        %v966 = vshrl.u32 %v858, 16
        %v968 = vrot.slane %v966, 4
        %v969 = vshll.u32 %v858, 16
        %v971 = vrot.slane %v969, 5
        %v972 = vor.u32 %v968, %v971
        %v973 = vrot.slane %v972, 4
        %v975 = vshll.u32 %v866, 16
        %v977 = vrot.slane %v975, 5
        %v978 = vsel %vm494, %v973, %v977
        %v979 = vld [vmem:[%s850] sm:$0xe]
        %v980 = vld [vmem:[%s850 + $0x8] sm:$0xe]
        %v981 = vld [vmem:[%s850 + $0x10] sm:$0xe]
        %v982 = vld [vmem:[%s850 + $0x18] sm:$0xe]
        %v983 = vld [vmem:[%s850 + $0x20] sm:$0xe]
        %v984 = vld [vmem:[%s850 + $0x28] sm:$0xe]
        %v985 = vld [vmem:[%s850 + $0x30] sm:$0xe]
        %v986 = vld [vmem:[%s850 + $0x38] sm:$0xe]
        %v1003 = vrot.slane %v979, 5
        %v1004 = vrot.slane %v1003, 4
        %v1005 = vrot.slane %v859, 5
        %v1006 = vsel %vm633, %v1004, %v1005
        %v1007 = vrot.slane %v980, 5
        %v1008 = vrot.slane %v1007, 4
        %v1009 = vrot.slane %v860, 5
        %v1010 = vsel %vm633, %v1008, %v1009
        %v1011 = vrot.slane %v981, 5
        %v1012 = vrot.slane %v1011, 4
        %v1013 = vrot.slane %v861, 5
        %v1014 = vsel %vm633, %v1012, %v1013
        %v1015 = vrot.slane %v982, 5
        %v1016 = vrot.slane %v1015, 4
        %v1017 = vrot.slane %v862, 5
        %v1018 = vsel %vm633, %v1016, %v1017
        %v1019 = vrot.slane %v983, 5
        %v1020 = vrot.slane %v1019, 4
        %v1021 = vrot.slane %v863, 5
        %v1022 = vsel %vm633, %v1020, %v1021
        %v1023 = vrot.slane %v984, 5
        %v1024 = vrot.slane %v1023, 4
        %v1025 = vrot.slane %v864, 5
        %v1026 = vsel %vm633, %v1024, %v1025
        %v1027 = vrot.slane %v985, 5
        %v1028 = vrot.slane %v1027, 4
        %v1029 = vrot.slane %v865, 5
        %v1030 = vsel %vm633, %v1028, %v1029
        %v1031 = vrot.slane %v986, 5
        %v1032 = vrot.slane %v1031, 4
        %v1033 = vrot.slane %v866, 5
        %v1034 = vsel %vm633, %v1032, %v1033
        %v1043 = vunpack.c.l.b16 %v476
        %v1044 = vunpack.c.l.b16 %v477
        %v1045 = vunpack.c.l.b16 %v478
        %v1046 = vunpack.c.l.b16 %v479
        %v1047 = vunpack.c.l.b16 %v480
        %v1048 = vunpack.c.l.b16 %v481
        %v1049 = vunpack.c.l.b16 %v482
        %v1050 = vunpack.c.l.b16 %v483
        %v1051 = vpack.c.b16 %v1044, %v1043
        %v1052 = vpack.c.b16 %v1046, %v1045
        %v1053 = vpack.c.b16 %v1048, %v1047
        %v1054 = vpack.c.b16 %v1050, %v1049
        %v1055 = vunpack.c.l.b16 %v508
        %v1056 = vunpack.c.l.b16 %v522
        %v1057 = vunpack.c.l.b16 %v536
        %v1058 = vunpack.c.l.b16 %v550
        %v1059 = vunpack.c.l.b16 %v564
        %v1060 = vunpack.c.l.b16 %v578
        %v1061 = vunpack.c.l.b16 %v592
        %v1062 = vunpack.c.l.b16 %v606
        %v1063 = vpack.c.b16 %v1056, %v1055
        %v1064 = vpack.c.b16 %v1058, %v1057
        %v1065 = vpack.c.b16 %v1060, %v1059
        %v1066 = vpack.c.b16 %v1062, %v1061
        %1067 = vrot.lane.b32.xlu0 %v1063, 32
        %v1068 = vpop.permute.xlu0 %1067
        %1069 = vrot.lane.b32.xlu0 %v1064, 32
        %v1070 = vpop.permute.xlu0 %1069
        %1071 = vrot.lane.b32.xlu0 %v1065, 32
        %v1072 = vpop.permute.xlu0 %1071
        %1073 = vrot.lane.b32.xlu0 %v1066, 32
        %v1074 = vpop.permute.xlu0 %1073
        %v1075 = vunpack.c.l.b16 %v637
        %v1076 = vunpack.c.l.b16 %v641
        %v1077 = vunpack.c.l.b16 %v645
        %v1078 = vunpack.c.l.b16 %v649
        %v1079 = vunpack.c.l.b16 %v653
        %v1080 = vunpack.c.l.b16 %v657
        %v1081 = vunpack.c.l.b16 %v661
        %v1082 = vunpack.c.l.b16 %v665
        %v1083 = vpack.c.b16 %v1076, %v1075
        %v1084 = vpack.c.b16 %v1078, %v1077
        %v1085 = vpack.c.b16 %v1080, %v1079
        %v1086 = vpack.c.b16 %v1082, %v1081
        %1087 = vrot.lane.b32.xlu0 %v1083, 64
        %v1088 = vpop.permute.xlu0 %1087
        %1089 = vrot.lane.b32.xlu0 %v1084, 64
        %v1090 = vpop.permute.xlu0 %1089
        %1091 = vrot.lane.b32.xlu0 %v1085, 64
        %v1092 = vpop.permute.xlu0 %1091
        %1093 = vrot.lane.b32.xlu0 %v1086, 64
        %v1094 = vpop.permute.xlu0 %1093
        %v1103 = vunpack.c.l.b16 %v666
        %v1104 = vunpack.c.l.b16 %v667
        %v1105 = vunpack.c.l.b16 %v668
        %v1106 = vunpack.c.l.b16 %v669
        %v1107 = vunpack.c.l.b16 %v670
        %v1108 = vunpack.c.l.b16 %v671
        %v1109 = vunpack.c.l.b16 %v672
        %v1110 = vunpack.c.l.b16 %v673
        %v1111 = vpack.c.b16 %v1104, %v1103
        %v1112 = vpack.c.b16 %v1106, %v1105
        %v1113 = vpack.c.b16 %v1108, %v1107
        %v1114 = vpack.c.b16 %v1110, %v1109
        %1115 = vrot.lane.b32.xlu0 %v1111, 96
        %v1116 = vpop.permute.xlu0 %1115
        %1117 = vrot.lane.b32.xlu0 %v1112, 96
        %v1118 = vpop.permute.xlu0 %1117
        %1119 = vrot.lane.b32.xlu0 %v1113, 96
        %v1120 = vpop.permute.xlu0 %1119
        %1121 = vrot.lane.b32.xlu0 %v1114, 96
        %v1122 = vpop.permute.xlu0 %1121
        %v1123 = vunpack.c.l.b16 %v695
        %v1124 = vunpack.c.l.b16 %v709
        %v1125 = vunpack.c.l.b16 %v723
        %v1126 = vunpack.c.l.b16 %v737
        %v1127 = vunpack.c.l.b16 %v751
        %v1128 = vunpack.c.l.b16 %v765
        %v1129 = vunpack.c.l.b16 %v779
        %v1130 = vunpack.c.l.b16 %v793
        %v1131 = vpack.c.b16 %v1124, %v1123
        %v1132 = vpack.c.b16 %v1126, %v1125
        %v1133 = vpack.c.b16 %v1128, %v1127
        %v1134 = vpack.c.b16 %v1130, %v1129
        %v1135 = vunpack.c.l.b16 %v821
        %v1136 = vunpack.c.l.b16 %v825
        %v1137 = vunpack.c.l.b16 %v829
        %v1138 = vunpack.c.l.b16 %v833
        %v1139 = vunpack.c.l.b16 %v837
        %v1140 = vunpack.c.l.b16 %v841
        %v1141 = vunpack.c.l.b16 %v845
        %v1142 = vunpack.c.l.b16 %v849
        %v1143 = vpack.c.b16 %v1136, %v1135
        %v1144 = vpack.c.b16 %v1138, %v1137
        %v1145 = vpack.c.b16 %v1140, %v1139
        %v1146 = vpack.c.b16 %v1142, %v1141
        %1147 = vrot.lane.b32.xlu0 %v1143, 32
        %v1148 = vpop.permute.xlu0 %1147
        %1149 = vrot.lane.b32.xlu0 %v1144, 32
        %v1150 = vpop.permute.xlu0 %1149
        %1151 = vrot.lane.b32.xlu0 %v1145, 32
        %v1152 = vpop.permute.xlu0 %1151
        %1153 = vrot.lane.b32.xlu0 %v1146, 32
        %v1154 = vpop.permute.xlu0 %1153
        %v1163 = vunpack.c.l.b16 %v851
        %v1164 = vunpack.c.l.b16 %v852
        %v1165 = vunpack.c.l.b16 %v853
        %v1166 = vunpack.c.l.b16 %v854
        %v1167 = vunpack.c.l.b16 %v855
        %v1168 = vunpack.c.l.b16 %v856
        %v1169 = vunpack.c.l.b16 %v857
        %v1170 = vunpack.c.l.b16 %v858
        %v1171 = vpack.c.b16 %v1164, %v1163
        %v1172 = vpack.c.b16 %v1166, %v1165
        %v1173 = vpack.c.b16 %v1168, %v1167
        %v1174 = vpack.c.b16 %v1170, %v1169
        %1175 = vrot.lane.b32.xlu0 %v1171, 64
        %v1176 = vpop.permute.xlu0 %1175
        %1177 = vrot.lane.b32.xlu0 %v1172, 64
        %v1178 = vpop.permute.xlu0 %1177
        %1179 = vrot.lane.b32.xlu0 %v1173, 64
        %v1180 = vpop.permute.xlu0 %1179
        %1181 = vrot.lane.b32.xlu0 %v1174, 64
        %v1182 = vpop.permute.xlu0 %1181
        %v1183 = vunpack.c.l.b16 %v880
        %v1184 = vunpack.c.l.b16 %v894
        %v1185 = vunpack.c.l.b16 %v908
        %v1186 = vunpack.c.l.b16 %v922
        %v1187 = vunpack.c.l.b16 %v936
        %v1188 = vunpack.c.l.b16 %v950
        %v1189 = vunpack.c.l.b16 %v964
        %v1190 = vunpack.c.l.b16 %v978
        %v1191 = vpack.c.b16 %v1184, %v1183
        %v1192 = vpack.c.b16 %v1186, %v1185
        %v1193 = vpack.c.b16 %v1188, %v1187
        %v1194 = vpack.c.b16 %v1190, %v1189
        %1195 = vrot.lane.b32.xlu0 %v1191, 96
        %v1196 = vpop.permute.xlu0 %1195
        %1197 = vrot.lane.b32.xlu0 %v1192, 96
        %v1198 = vpop.permute.xlu0 %1197
        %1199 = vrot.lane.b32.xlu0 %v1193, 96
        %v1200 = vpop.permute.xlu0 %1199
        %1201 = vrot.lane.b32.xlu0 %v1194, 96
        %v1202 = vpop.permute.xlu0 %1201
        %v1203 = vunpack.c.l.b16 %v1006
        %v1204 = vunpack.c.l.b16 %v1010
        %v1205 = vunpack.c.l.b16 %v1014
        %v1206 = vunpack.c.l.b16 %v1018
        %v1207 = vunpack.c.l.b16 %v1022
        %v1208 = vunpack.c.l.b16 %v1026
        %v1209 = vunpack.c.l.b16 %v1030
        %v1210 = vunpack.c.l.b16 %v1034
        %v1211 = vpack.c.b16 %v1204, %v1203
        %v1212 = vpack.c.b16 %v1206, %v1205
        %v1213 = vpack.c.b16 %v1208, %v1207
        %v1214 = vpack.c.b16 %v1210, %v1209
        %vm1215 = vcmask 261120
        %v1218 = vsel %vm1215, %v1051, %v1068
        %v1221 = vsel %vm1215, %v1052, %v1070
        %v1224 = vsel %vm1215, %v1053, %v1072
        %v1227 = vsel %vm1215, %v1054, %v1074
        %vm1228 = vcmask 523264
        %v1230 = vsel %vm1228, %v1218, %v1088
        %v1232 = vsel %vm1228, %v1221, %v1090
        %v1234 = vsel %vm1228, %v1224, %v1092
        %v1236 = vsel %vm1228, %v1227, %v1094
        %vm1237 = vcmask 785408
        %v1239 = vsel %vm1237, %v1230, %v1116
        %v1242 = vsel %vm1237, %v1232, %v1118
        %v1245 = vsel %vm1237, %v1234, %v1120
        %v1248 = vsel %vm1237, %v1236, %v1122
        %v1252 = vsel %vm1215, %v1131, %v1148
        %v1255 = vsel %vm1215, %v1132, %v1150
        %v1258 = vsel %vm1215, %v1133, %v1152
        %v1261 = vsel %vm1215, %v1134, %v1154
        %v1263 = vsel %vm1228, %v1252, %v1176
        %v1265 = vsel %vm1228, %v1255, %v1178
        %v1267 = vsel %vm1228, %v1258, %v1180
        %v1269 = vsel %vm1228, %v1261, %v1182
        %v1271 = vsel %vm1237, %v1263, %v1196
        %v1274 = vsel %vm1237, %v1265, %v1198
        %v1277 = vsel %vm1237, %v1267, %v1200
        %v1280 = vsel %vm1237, %v1269, %v1202
        %v1282 = vld [vmem:[%s2] sm:$0xf]
        %v1283 = vld [vmem:[%s2 + $0x4] sm:$0xf]
        %v1284 = vld [vmem:[%s2 + $0x8] sm:$0xf]
        %v1285 = vld [vmem:[%s2 + $0xc] sm:$0xf]
        %v1286 = vld [vmem:[%s2 + $0x10] sm:$0xf]
        %v1287 = vld [vmem:[%s2 + $0x14] sm:$0xf]
        %v1288 = vld [vmem:[%s2 + $0x18] sm:$0xf]
        %v1289 = vld [vmem:[%s2 + $0x1c] sm:$0xf]
        %v1290 = vld [vmem:[%s2 + $0x20] sm:$0xf]
        %v1291 = vld [vmem:[%s2 + $0x24] sm:$0xf]
        %v1292 = vld [vmem:[%s2 + $0x28] sm:$0xf]
        %v1293 = vld [vmem:[%s2 + $0x2c] sm:$0xf]
        %v1294 = vld [vmem:[%s2 + $0x30] sm:$0xf]
        %v1295 = vld [vmem:[%s2 + $0x34] sm:$0xf]
        %v1296 = vld [vmem:[%s2 + $0x38] sm:$0xf]
        %v1297 = vld [vmem:[%s2 + $0x3c] sm:$0xf]
        %v1298 = vld [vmem:[%s2 + $0x40] sm:$0xf]
        %v1299 = vld [vmem:[%s2 + $0x44] sm:$0xf]
        %v1300 = vld [vmem:[%s2 + $0x48] sm:$0xf]
        %v1301 = vld [vmem:[%s2 + $0x4c] sm:$0xf]
        %v1302 = vld [vmem:[%s2 + $0x50] sm:$0xf]
        %v1303 = vld [vmem:[%s2 + $0x54] sm:$0xf]
        %v1304 = vld [vmem:[%s2 + $0x58] sm:$0xf]
        %v1305 = vld [vmem:[%s2 + $0x5c] sm:$0xf]
        %v1306 = vld [vmem:[%s2 + $0x60] sm:$0xf]
        %v1307 = vld [vmem:[%s2 + $0x64] sm:$0xf]
        %v1308 = vld [vmem:[%s2 + $0x68] sm:$0xf]
        %v1309 = vld [vmem:[%s2 + $0x6c] sm:$0xf]
        %v1310 = vld [vmem:[%s2 + $0x70] sm:$0xf]
        %v1311 = vld [vmem:[%s2 + $0x74] sm:$0xf]
        %v1312 = vld [vmem:[%s2 + $0x78] sm:$0xf]
        %v1313 = vld [vmem:[%s2 + $0x7c] sm:$0xf]
        %v1314 = vld [vmem:[%s2 + $0x80] sm:$0xf]
        %v1315 = vld [vmem:[%s2 + $0x84] sm:$0xf]
        %v1316 = vld [vmem:[%s2 + $0x88] sm:$0xf]
        %v1317 = vld [vmem:[%s2 + $0x8c] sm:$0xf]
        %v1318 = vld [vmem:[%s5] sm:$0x1]
        %v1320 = vperm.slane %v1318, 0
        %v1358 = vunpack.c.l.b16 %v1282
        %v1359 = vunpack.c.l.b16 %v1283
        %v1360 = vunpack.c.l.b16 %v1284
        %v1361 = vunpack.c.l.b16 %v1285
        %v1362 = vunpack.c.l.b16 %v1286
        %v1363 = vunpack.c.l.b16 %v1287
        %v1364 = vunpack.c.l.b16 %v1288
        %v1365 = vunpack.c.l.b16 %v1289
        %v1366 = vunpack.c.l.b16 %v1290
        %v1367 = vunpack.c.l.b16 %v1291
        %v1368 = vunpack.c.l.b16 %v1292
        %v1369 = vunpack.c.l.b16 %v1293
        %v1370 = vunpack.c.l.b16 %v1294
        %v1371 = vunpack.c.l.b16 %v1295
        %v1372 = vunpack.c.l.b16 %v1296
        %v1373 = vunpack.c.l.b16 %v1297
        %v1374 = vunpack.c.l.b16 %v1298
        %v1375 = vunpack.c.l.b16 %v1299
        %v1376 = vunpack.c.l.b16 %v1300
        %v1377 = vunpack.c.l.b16 %v1301
        %v1378 = vunpack.c.l.b16 %v1302
        %v1379 = vunpack.c.l.b16 %v1303
        %v1380 = vunpack.c.l.b16 %v1304
        %v1381 = vunpack.c.l.b16 %v1305
        %v1382 = vunpack.c.l.b16 %v1306
        %v1383 = vunpack.c.l.b16 %v1307
        %v1384 = vunpack.c.l.b16 %v1308
        %v1385 = vunpack.c.l.b16 %v1309
        %v1386 = vunpack.c.l.b16 %v1310
        %v1387 = vunpack.c.l.b16 %v1311
        %v1388 = vunpack.c.l.b16 %v1312
        %v1389 = vunpack.c.l.b16 %v1313
        %v1390 = vunpack.c.l.b16 %v1314
        %v1391 = vunpack.c.l.b16 %v1315
        %v1392 = vunpack.c.l.b16 %v1316
        %v1393 = vunpack.c.l.b16 %v1317
        %v1394 = vpack.c.b16 %v1359, %v1358
        %v1395 = vpack.c.b16 %v1361, %v1360
        %v1396 = vpack.c.b16 %v1363, %v1362
        %v1397 = vpack.c.b16 %v1365, %v1364
        %v1398 = vpack.c.b16 %v1367, %v1366
        %v1399 = vpack.c.b16 %v1369, %v1368
        %v1400 = vpack.c.b16 %v1371, %v1370
        %v1401 = vpack.c.b16 %v1373, %v1372
        %v1402 = vpack.c.b16 %v1375, %v1374
        %v1403 = vpack.c.b16 %v1377, %v1376
        %v1404 = vpack.c.b16 %v1379, %v1378
        %v1405 = vpack.c.b16 %v1381, %v1380
        %v1406 = vpack.c.b16 %v1383, %v1382
        %v1407 = vpack.c.b16 %v1385, %v1384
        %v1408 = vpack.c.b16 %v1387, %v1386
        %v1409 = vpack.c.b16 %v1389, %v1388
        %v1410 = vpack.c.b16 %v1391, %v1390
        %v1411 = vpack.c.b16 %v1393, %v1392
        %v1431 = vsel %vm1215, %v1211, 0
        %v1434 = vsel %vm1215, %v1212, 0
        %v1437 = vsel %vm1215, %v1213, 0
        %v1440 = vsel %vm1215, %v1214, 0
        %1442 = vmatpush.bf16.msra.mxu0 %v1401
        %1443 = vmatpush.bf16.msra.mxu0 %v1400
        %1444 = vmatpush.bf16.msra.mxu0 %v1399
        %1445 = vmatpush.bf16.msra.mxu0 %v1398
        %1446 = vmatpush.bf16.msra.mxu0 %v1397
        %1447 = vmatpush.bf16.msra.mxu0 %v1396
        %1448 = vmatpush.bf16.msra.mxu0 %v1395
        %1449 = vmatpush.bf16.msra.mxu0 %v1394
        %1450 = vmatmul.bf16.gmra.mxu0 %v1239
        %v1451 = vpop.f32.mrf.mxu0
        %v1452 = vadd.f32 %v1320, %v1451
        %v1453 = vpop.f32.mrf.mxu0
        %v1454 = vadd.f32 %v1320, %v1453
        %1455 = vmatmul.bf16.gmra.mxu0 %v1242
        %v1456 = vpop.f32.mrf.mxu0
        %v1457 = vadd.f32 %v1320, %v1456
        %v1458 = vpop.f32.mrf.mxu0
        %v1459 = vadd.f32 %v1320, %v1458
        %1460 = vmatmul.bf16.gmra.mxu0 %v1245
        %v1461 = vpop.f32.mrf.mxu0
        %v1462 = vadd.f32 %v1320, %v1461
        %v1463 = vpop.f32.mrf.mxu0
        %v1464 = vadd.f32 %v1320, %v1463
        %1465 = vmatmul.bf16.gmra.mxu0 %v1248
        %v1466 = vpop.f32.mrf.mxu0
        %v1467 = vadd.f32 %v1320, %v1466
        %v1468 = vpop.f32.mrf.mxu0
        %v1469 = vadd.f32 %v1320, %v1468
        %1470 = vdwg.mxu0
        %1471 = vmatpush.bf16.msra.mxu0 %v1409
        %1472 = vmatpush.bf16.msra.mxu0 %v1408
        %1473 = vmatpush.bf16.msra.mxu0 %v1407
        %1474 = vmatpush.bf16.msra.mxu0 %v1406
        %1475 = vmatpush.bf16.msra.mxu0 %v1405
        %1476 = vmatpush.bf16.msra.mxu0 %v1404
        %1477 = vmatpush.bf16.msra.mxu0 %v1403
        %1478 = vmatpush.bf16.msra.mxu0 %v1402
        %1479 = vmatmul.bf16.gmra.mxu0 %v1271
        %v1480 = vpop.f32.mrf.mxu0
        %v1481 = vadd.f32 %v1452, %v1480
        %v1482 = vpop.f32.mrf.mxu0
        %v1483 = vadd.f32 %v1454, %v1482
        %1484 = vmatmul.bf16.gmra.mxu0 %v1274
        %v1485 = vpop.f32.mrf.mxu0
        %v1486 = vadd.f32 %v1457, %v1485
        %v1487 = vpop.f32.mrf.mxu0
        %v1488 = vadd.f32 %v1459, %v1487
        %1489 = vmatmul.bf16.gmra.mxu0 %v1277
        %v1490 = vpop.f32.mrf.mxu0
        %v1491 = vadd.f32 %v1462, %v1490
        %v1492 = vpop.f32.mrf.mxu0
        %v1493 = vadd.f32 %v1464, %v1492
        %1494 = vmatmul.bf16.gmra.mxu0 %v1280
        %v1495 = vpop.f32.mrf.mxu0
        %v1496 = vadd.f32 %v1467, %v1495
        %v1497 = vpop.f32.mrf.mxu0
        %v1498 = vadd.f32 %v1469, %v1497
        %1499 = vdwg.mxu0
        %1500 = vmatpush.bf16.msra.mxu0 0
        %1501 = vmatpush.bf16.msra.mxu0 0
        %1502 = vmatpush.bf16.msra.mxu0 0
        %1503 = vmatpush.bf16.msra.mxu0 0
        %1504 = vmatpush.bf16.msra.mxu0 0
        %1505 = vmatpush.bf16.msra.mxu0 0
        %1506 = vmatpush.bf16.msra.mxu0 %v1411
        %1507 = vmatpush.bf16.msra.mxu0 %v1410
        %1508 = vmatmul.bf16.gmra.mxu0 %v1431
        %v1509 = vpop.f32.mrf.mxu0
        %v1510 = vadd.f32 %v1481, %v1509
        %v1511 = vpop.f32.mrf.mxu0
        %v1512 = vadd.f32 %v1483, %v1511
        %1513 = vmatmul.bf16.gmra.mxu0 %v1434
        %v1514 = vpop.f32.mrf.mxu0
        %v1515 = vadd.f32 %v1486, %v1514
        %v1516 = vpop.f32.mrf.mxu0
        %v1517 = vadd.f32 %v1488, %v1516
        %1518 = vmatmul.bf16.gmra.mxu0 %v1437
        %v1519 = vpop.f32.mrf.mxu0
        %v1520 = vadd.f32 %v1491, %v1519
        %v1521 = vpop.f32.mrf.mxu0
        %v1522 = vadd.f32 %v1493, %v1521
        %1523 = vmatmul.bf16.gmra.mxu0 %v1440
        %v1524 = vpop.f32.mrf.mxu0
        %v1525 = vadd.f32 %v1496, %v1524
        %v1526 = vpop.f32.mrf.mxu0
        %v1527 = vadd.f32 %v1498, %v1526
        %1528 = vdwg.mxu0
        %v1529 = vmax.f32 %v1510, 0.0
        %v1530 = vmax.f32 %v1512, 0.0
        %v1531 = vmax.f32 %v1515, 0.0
        %v1532 = vmax.f32 %v1517, 0.0
        %v1533 = vmax.f32 %v1520, 0.0
        %v1534 = vmax.f32 %v1522, 0.0
        %v1535 = vmax.f32 %v1525, 0.0
        %v1536 = vmax.f32 %v1527, 0.0
        %v1537 = vpack.c.bf16 %v1530, %v1529
        %v1538 = vpack.c.bf16 %v1532, %v1531
        %v1539 = vpack.c.bf16 %v1534, %v1533
        %v1540 = vpack.c.bf16 %v1536, %v1535
        %v1541 = vld [vmem:[%s3] sm:$0xf]
        %v1542 = vld [vmem:[%s3 + $0x4] sm:$0xf]
        %v1543 = vld [vmem:[%s3 + $0x8] sm:$0xf]
        %v1544 = vld [vmem:[%s3 + $0xc] sm:$0xf]
        %v1545 = vld [vmem:[%s6] sm:$0x1]
        %v1547 = vperm.slane %v1545, 0
        %v1553 = vunpack.c.l.b16 %v1541
        %v1554 = vunpack.c.l.b16 %v1542
        %v1555 = vunpack.c.l.b16 %v1543
        %v1556 = vunpack.c.l.b16 %v1544
        %v1557 = vpack.c.b16 %v1554, %v1553
        %v1558 = vpack.c.b16 %v1556, %v1555
        %v1562 = vsel %vm1215, %v1537, 0
        %v1565 = vsel %vm1215, %v1538, 0
        %v1568 = vsel %vm1215, %v1539, 0
        %v1571 = vsel %vm1215, %v1540, 0
        %1573 = vmatpush.bf16.msra.mxu0 0
        %1574 = vmatpush.bf16.msra.mxu0 0
        %1575 = vmatpush.bf16.msra.mxu0 0
        %1576 = vmatpush.bf16.msra.mxu0 0
        %1577 = vmatpush.bf16.msra.mxu0 0
        %1578 = vmatpush.bf16.msra.mxu0 0
        %1579 = vmatpush.bf16.msra.mxu0 %v1558
        %1580 = vmatpush.bf16.msra.mxu0 %v1557
        %1581 = vmatmul.bf16.gmra.mxu0 %v1562
        %v1582 = vpop.f32.mrf.mxu0
        %v1583 = vadd.f32 %v1547, %v1582
        %v1584 = vpop.f32.mrf.mxu0
        %v1585 = vadd.f32 %v1547, %v1584
        %1586 = vmatmul.bf16.gmra.mxu0 %v1565
        %v1587 = vpop.f32.mrf.mxu0
        %v1588 = vadd.f32 %v1547, %v1587
        %v1589 = vpop.f32.mrf.mxu0
        %v1590 = vadd.f32 %v1547, %v1589
        %1591 = vmatmul.bf16.gmra.mxu0 %v1568
        %v1592 = vpop.f32.mrf.mxu0
        %v1593 = vadd.f32 %v1547, %v1592
        %v1594 = vpop.f32.mrf.mxu0
        %v1595 = vadd.f32 %v1547, %v1594
        %1596 = vmatmul.bf16.gmra.mxu0 %v1571
        %v1597 = vpop.f32.mrf.mxu0
        %v1598 = vadd.f32 %v1547, %v1597
        %v1599 = vpop.f32.mrf.mxu0
        %v1600 = vadd.f32 %v1547, %v1599
        %1601 = vdwg.mxu0
        %v1602 = vadd.f32 %v1583, %v278
        %v1603 = vadd.f32 %v1585, %v279
        %v1604 = vadd.f32 %v1588, %v280
        %v1605 = vadd.f32 %v1590, %v281
        %v1606 = vadd.f32 %v1593, %v282
        %v1607 = vadd.f32 %v1595, %v283
        %v1608 = vadd.f32 %v1598, %v284
        %v1609 = vadd.f32 %v1600, %v285
        %v1610 = vmax.f32 %v1602, 0.0
        %v1611 = vmax.f32 %v1603, 0.0
        %v1612 = vmax.f32 %v1604, 0.0
        %v1613 = vmax.f32 %v1605, 0.0
        %v1614 = vmax.f32 %v1606, 0.0
        %v1615 = vmax.f32 %v1607, 0.0
        %v1616 = vmax.f32 %v1608, 0.0
        %v1617 = vmax.f32 %v1609, 0.0
        %1618 = vst [vmem:[%s271] sm:$0xff] %v1610
        %1619 = vst [vmem:[%s271 + $0x8] sm:$0xff] %v1611
        %1620 = vst [vmem:[%s271 + $0x10] sm:$0xff] %v1612
        %1621 = vst [vmem:[%s271 + $0x18] sm:$0xff] %v1613
        %1622 = vst [vmem:[%s271 + $0x20] sm:$0xff] %v1614
        %1623 = vst [vmem:[%s271 + $0x28] sm:$0xff] %v1615
        %1624 = vst [vmem:[%s271 + $0x30] sm:$0xff] %v1616
        %1625 = vst [vmem:[%s271 + $0x38] sm:$0xff] %v1617
        %s1626 = sand.u32 %s181, 1
        %s1627 = scalar_lea.sflag [#allocation4], %s1626
        %s1628 = sand.u32 %s181, 1
        %s1629 = smul.addr %s1628, 64
        %s1630 = scalar_lea.vmem [#allocation3], %s1629
        // Predicated region
        $region49: #{tpu_custom_call.1} parent=47 // pred_check
          %p1631 = pneg %p191
        $region50: #{tpu_custom_call.1} parent=47 // pred_check_branch
          %1633 = sbr.rel (%p1631) target = $region52
        $region51: #{tpu_custom_call.1} parent=47 // pred_region
          %1635 = vsyncadd %s1627, 0
          %s1636 = smul.addr %s21, 8
          %s1637 = smul.addr %s1636, 8
          %s1638 = scalar_lea.hbm %s7, %s1637
          %s1639 = sshll.u32 %s1630, 4
          %s1640 = int_to_ptr.vmem [resolvable:$true] %s1639
          %s1641 = sshll.u32 %s1638, 4
          %s1642 = int_to_ptr.hbm [resolvable:$true] %s1641
          %1647 = dma.vmem_to_hbm [thread:$0]  %s1640, 1024, %s1642, %s1627, 128, 128, 8
        $region52: #{tpu_custom_call.1} parent=47 // pred_fallthru
          _
      $region48: #{tpu_custom_call.1} parent=5 // pred_fallthru
        _
      %p1648 = scmp.le.s32.totalorder 2, %s16
      // Predicated region
      $region53: #{tpu_custom_call.1} parent=5 // pred_check
        %p1649 = pneg %p1648
      $region54: #{tpu_custom_call.1} parent=5 // pred_check_branch
        %1651 = sbr.rel (%p1649) target = $region56
      $region55: #{tpu_custom_call.1} parent=5 // pred_region
        %s1652 = ssub.s32 %s16, 2
        // Predicated region
        $region57: #{tpu_custom_call.1} parent=55 // pred_check
          %p1653 = pneg %p197
        $region58: #{tpu_custom_call.1} parent=55 // pred_check_branch
          %1655 = sbr.rel (%p1653) target = $region60
        $region59: #{tpu_custom_call.1} parent=55 // pred_region
          %s1656 = sand.u32 %s182, 1
          %s1657 = scalar_lea.sflag [#allocation4], %s1656
          %s1658 = sand.u32 %s182, 1
          %s1659 = smul.addr %s1658, 64
          %s1660 = scalar_lea.vmem [#allocation3], %s1659
          %1662 = dma.done %s1657, 1024
        $region60: #{tpu_custom_call.1} parent=55 // pred_fallthru
          _
      $region56: #{tpu_custom_call.1} parent=5 // pred_fallthru
        _
    $region6: #{tpu_custom_call.1} parent=1 // loop_footer
      %s20 = sadd.s32 1, %s16
    $region7: #{tpu_custom_call.1} parent=1 // loop_footer_branch
      %15 = sbr.rel target = $region3
    $region8: #{tpu_custom_call.1} parent=1 // loop_exit
      _
    %1663 = vsyncpa [#allocation4], 1
    %s1664 = scalar_lea.sflag [#allocation4], 1
    %1665 = vsyncpa %s1664, 1

</llo_original>
